<compile_context>
chip_gen: v7x
topology: tpu7x:2x2x1
jax: 0.10.0
libtpu: 0.0.40
codegen_flags: <defaults>
</compile_context>

<pallas_src>
import numpy as np
import jax
import jax.numpy as jnp
from jax import lax
from jax.experimental import pallas as pl
from jax.experimental.pallas import tpu as pltpu

NUM_ROTORS = 4
NUM_FEATS = 11            # quat(4) + ang_vel(3) + thrust + yaw_rate + roll + pitch
LANES = 128               # batch-on-lanes
CHUNK_R = 8               # sublane rows per inner iteration (one vreg per temp)
CHUNK_ALIGN = 2 * CHUNK_R  # tiles are multiples of 16 rows so unroll=2 divides evenly
MAX_TILE_R = 512          # rows per grid step (512 * 128 = 65536 samples)


def _cdiv(a, b):
    return -(-a // b)


def _round_up(a, b):
    return _cdiv(a, b) * b


# --------------------------------------------------------------------------
# Parameter construction (host-side numpy; mirrors AttitudeController.__init__
# and compute_parameters). Deterministic synthetic quadrotor configuration.
# --------------------------------------------------------------------------
def make_params():
    rotor_angles = np.array([np.pi / 4, 3 * np.pi / 4, 5 * np.pi / 4, 7 * np.pi / 4])
    arm_lengths = np.full(NUM_ROTORS, 0.17)
    force_constants = np.full(NUM_ROTORS, 8.54858e-6)
    moment_constants = np.full(NUM_ROTORS, 1.6e-2)
    directions = np.array([1.0, -1.0, 1.0, -1.0])
    max_rot_vel = np.full(NUM_ROTORS, 838.0)
    inertia_diag = np.array([0.007, 0.007, 0.012])  # xx, yy, zz
    mass = 0.716
    g = 9.81

    I4 = np.diag(np.concatenate([inertia_diag, [1.0]]))

    # compute_parameters(rotor_config, I)
    A = np.stack([
        np.sin(rotor_angles) * arm_lengths,
        -np.cos(rotor_angles) * arm_lengths,
        -directions * moment_constants / force_constants,
        np.ones_like(rotor_angles),
    ])                                                     # (4, num_rotors)
    mixer = A.T @ np.linalg.inv(A @ A.T) @ I4              # (num_rotors, 4)

    max_thrusts = np.square(max_rot_vel) * force_constants  # (num_rotors,)
    I3_inv = np.diag(1.0 / inertia_diag)
    gain_attitude = np.array([3.0, 3.0, 0.035]) @ I3_inv
    gain_angular_rate = np.array([0.52, 0.52, 0.025]) @ I3_inv

    return dict(
        mass=np.float32(mass), g=np.float32(g),
        mixer=mixer.astype(np.float32),
        max_thrusts=max_thrusts.astype(np.float32),
        gain_attitude=gain_attitude.astype(np.float32),
        gain_angular_rate=gain_angular_rate.astype(np.float32),
    )


# --------------------------------------------------------------------------
# Pallas kernel factory: constants baked in as compile-time scalars.
# --------------------------------------------------------------------------
def _make_attitude_kernel(ga, gr, mixer_scaled, tile_r, chunk_r):
    ga0, ga1, _ = (float(v) for v in ga)            # angle_error z-component is exactly 0
    gr0, gr1, gr2 = (float(v) for v in gr)
    ms = [[float(v) for v in row] for row in mixer_scaled]  # (4, NUM_ROTORS)
    n_chunks = tile_r // chunk_r                            # even by construction

    def kernel(x_ref, out_ref):
        # x_ref: (11, tile_r, 128), out_ref: (4, tile_r, 128)
        def body(c, carry):
            r0 = pl.multiple_of(c * chunk_r, chunk_r)
            sl = pl.ds(r0, chunk_r)

            qw = x_ref[0, sl, :]
            qx = x_ref[1, sl, :]
            qy = x_ref[2, sl, :]
            qz = x_ref[3, sl, :]
            w0 = x_ref[4, sl, :]
            w1 = x_ref[5, sl, :]
            w2 = x_ref[6, sl, :]
            thrust = x_ref[7, sl, :]
            yaw_rate = x_ref[8, sl, :]
            phi = x_ref[9, sl, :]        # target roll
            theta = x_ref[10, sl, :]     # target pitch

            # quaternion (w, x, y, z) -> rotation matrix (with 2/|q|^2 scale).
            # approx reciprocal goes to the (nearly idle) EUP slot.
            norm2 = qw * qw + qx * qx + qy * qy + qz * qz
            two_s = 2.0 * pl.reciprocal(norm2, approx=True)
            r00 = 1.0 - two_s * (qy * qy + qz * qz)
            r01 = two_s * (qx * qy - qz * qw)
            r02 = two_s * (qx * qz + qy * qw)
            r10 = two_s * (qx * qy + qz * qw)
            r11 = 1.0 - two_s * (qx * qx + qz * qz)
            r12 = two_s * (qy * qz - qx * qw)
            r20 = two_s * (qx * qz - qy * qw)
            r21 = two_s * (qy * qz + qx * qw)
            r22 = 1.0 - two_s * (qx * qx + qy * qy)

            # cos/sin of current yaw without atan2: normalize (r00, r10).
            # Guard the singular attitude r00 ~ r10 ~ 0 to match atan2(0,0)=0.
            h2 = r00 * r00 + r10 * r10
            safe = h2 > 1e-12
            inv_h = lax.rsqrt(jnp.where(safe, h2, 1.0))
            cy = jnp.where(safe, r00 * inv_h, 1.0)
            sy = jnp.where(safe, r10 * inv_h, 0.0)

            cr = jnp.cos(phi)
            sr = jnp.sin(phi)
            ct = jnp.cos(theta)
            st = jnp.sin(theta)

            # R_des = Rz(yaw) @ Rx(roll) @ Ry(pitch), expanded analytically.
            d00 = cy * ct - sy * sr * st
            d01 = -sy * cr
            d02 = cy * st + sy * sr * ct
            d10 = sy * ct + cy * sr * st
            d11 = cy * cr
            d12 = sy * st - cy * sr * ct
            d20 = -cr * st
            d21 = sr
            d22 = cr * ct

            # Needed entries of M = R_des^T @ R
            m02 = d00 * r02 + d10 * r12 + d20 * r22
            m12 = d01 * r02 + d11 * r12 + d21 * r22
            m22 = d02 * r02 + d12 * r12 + d22 * r22
            m20 = d02 * r00 + d12 * r10 + d22 * r20
            m21 = d02 * r01 + d12 * r11 + d22 * r21

            # angle_error = [0.5*(M21 - M12), 0.5*(M02 - M20), 0]
            ae0 = 0.5 * (m21 - m12)
            ae1 = 0.5 * (m02 - m20)

            # angular_rate_error = ang_vel - M @ [0, 0, yaw_rate]
            are0 = w0 - m02 * yaw_rate
            are1 = w1 - m12 * yaw_rate
            are2 = w2 - m22 * yaw_rate

            # angular_acc (cross(w, w) == 0 identically, omitted)
            aa0 = -ae0 * ga0 - are0 * gr0
            aa1 = -ae1 * ga1 - are1 * gr1
            aa2 = -are2 * gr2

            # cmd_j = sum_k aat_k * mixer_scaled[k, j] - 1  (mixer_scaled = mixer^T * 2/max_thr)
            for j in range(NUM_ROTORS):
                out_ref[j, sl, :] = (aa0 * ms[0][j] + aa1 * ms[1][j]
                                     + aa2 * ms[2][j] + thrust * ms[3][j] - 1.0)
            return carry

        # unroll=2: tile_r is a multiple of 16, so n_chunks is even and the
        # unroll divides exactly; keeps ~60 live vregs (< 64) instead of
        # spilling under a full unroll of up to 64 chunks.
        lax.fori_loop(0, n_chunks, body, 0, unroll=2)

    return kernel


# --------------------------------------------------------------------------
# Wrapper (forward): fuse the 11 used features, lane-dense layout, call kernel.
# --------------------------------------------------------------------------
def attitude_controller_forward(params, root_state, target_thrust,
                                target_yaw_rate=None, target_roll=None,
                                target_pitch=None):
    batch_shape = root_state.shape[:-1]
    n = int(np.prod(batch_shape)) if batch_shape else 1
    if n == 0:
        return jnp.zeros((*batch_shape, NUM_ROTORS), jnp.float32)

    rs = jnp.asarray(root_state, jnp.float32).reshape(n, 13)

    def _tgt(t):
        if t is None:
            return jnp.zeros((n, 1), jnp.float32)
        return jnp.asarray(t, jnp.float32).reshape(n, 1)

    # Only the features the controller actually reads (pos/vel dropped): 11 planes.
    x = jnp.concatenate(
        [rs[:, 3:7],            # quat (w, x, y, z)
         rs[:, 10:13],          # ang_vel
         _tgt(target_thrust), _tgt(target_yaw_rate),
         _tgt(target_roll), _tgt(target_pitch)], axis=1)      # (n, 11)

    # ----- tile selection: lane-dense layout, batch -> (rows, 128) planes -----
    rows = _cdiv(n, LANES)
    # >= 2 grid steps whenever there is enough work (v7x has 2 TensorCores),
    # and enough tiles that padding waste stays small for awkward row counts.
    num_tiles = max(_cdiv(rows, MAX_TILE_R), 2 if rows > CHUNK_ALIGN else 1)
    tile_r = min(MAX_TILE_R, _round_up(_cdiv(rows, num_tiles), CHUNK_ALIGN))
    r_pad = _round_up(rows, tile_r)
    n_pad = r_pad * LANES
    if n_pad > n:
        x = jnp.pad(x, ((0, n_pad - n), (0, 0)), mode="edge")  # valid data, sliced off later

    # TODO(synk): in an end-to-end RL loop the state should stay resident in this
    # (feat, rows, 128) layout across timesteps so this transpose (and the output
    # transpose below) disappear from end-to-end HBM traffic; as a standalone
    # module we must accept the sample-major input dictated by the spec.
    x_fm = x.T.reshape(NUM_FEATS, r_pad, LANES)                # (11, r_pad, 128)

    # Fold max_thrusts and the *2.0 into the mixer (kills the per-element divide).
    ga = np.asarray(params["gain_attitude"], np.float32)
    gr = np.asarray(params["gain_angular_rate"], np.float32)
    mixer = np.asarray(params["mixer"], np.float32)            # (num_rotors, 4)
    max_thr = np.asarray(params["max_thrusts"], np.float32)    # (num_rotors,)
    mixer_scaled = mixer.T * (2.0 / max_thr)[None, :]          # (4, num_rotors)

    kernel = _make_attitude_kernel(ga, gr, mixer_scaled, tile_r, CHUNK_R)
    grid = (r_pad // tile_r,)

    cost = pl.CostEstimate(
        flops=150 * n_pad,
        transcendentals=6 * n_pad,
        bytes_accessed=(NUM_FEATS + NUM_ROTORS) * 4 * n_pad,
    )

    out = pl.pallas_call(
        kernel,
        out_shape=jax.ShapeDtypeStruct((NUM_ROTORS, r_pad, LANES), jnp.float32),
        grid_spec=pltpu.PrefetchScalarGridSpec(
            num_scalar_prefetch=0,
            grid=grid,
            in_specs=[pl.BlockSpec((NUM_FEATS, tile_r, LANES), lambda i: (0, i, 0))],
            out_specs=pl.BlockSpec((NUM_ROTORS, tile_r, LANES), lambda i: (0, i, 0)),
        ),
        compiler_params=pltpu.CompilerParams(
            dimension_semantics=("parallel",),
            # double-buffered (11+4)-plane tiles at tile_r=512 are ~8 MB;
            # raise the scoped limit so v5e's 16 MiB default never bites.
            vmem_limit_bytes=32 << 20,
        ),
        cost_estimate=cost,
    )(x_fm)

    cmd = out.reshape(NUM_ROTORS, n_pad).T[:n]                  # (n, num_rotors)
    return cmd.reshape(*batch_shape, NUM_ROTORS)


# --------------------------------------------------------------------------
# Pure-JAX reference (mirrors the PyTorch _compute) for validation.
# --------------------------------------------------------------------------
def _axis_angle_to_matrix(angle, axis):
    c = jnp.cos(angle)[:, None, None]
    s = jnp.sin(angle)[:, None, None]
    K = jnp.array([[0.0, -axis[2], axis[1]],
                   [axis[2], 0.0, -axis[0]],
                   [-axis[1], axis[0], 0.0]], jnp.float32)
    return c * jnp.eye(3, dtype=jnp.float32) + s * K + (1.0 - c) * jnp.outer(axis, axis)


def _quat_to_rotmat(q):
    w, x, y, z = q[:, 0], q[:, 1], q[:, 2], q[:, 3]
    two_s = 2.0 / jnp.sum(q * q, axis=-1)
    R = jnp.stack([
        1 - two_s * (y * y + z * z), two_s * (x * y - z * w), two_s * (x * z + y * w),
        two_s * (x * y + z * w), 1 - two_s * (x * x + z * z), two_s * (y * z - x * w),
        two_s * (x * z - y * w), two_s * (y * z + x * w), 1 - two_s * (x * x + y * y),
    ], axis=-1).reshape(-1, 3, 3)
    return R


def reference_forward(params, root_state, target_thrust, target_yaw_rate,
                      target_roll, target_pitch):
    batch_shape = root_state.shape[:-1]
    rs = jnp.asarray(root_state, jnp.float32).reshape(-1, 13)
    n = rs.shape[0]
    tt = jnp.asarray(target_thrust, jnp.float32).reshape(n, 1)
    tyr = jnp.asarray(target_yaw_rate, jnp.float32).reshape(n, 1)
    trl = jnp.asarray(target_roll, jnp.float32).reshape(n, 1)
    tpi = jnp.asarray(target_pitch, jnp.float32).reshape(n, 1)

    rot = rs[:, 3:7]
    ang_vel = rs[:, 10:13]
    R = _quat_to_rotmat(rot)
    yaw = jnp.arctan2(R[:, 1, 0], R[:, 0, 0])
    Y = _axis_angle_to_matrix(yaw, jnp.array([0.0, 0.0, 1.0], jnp.float32))
    Rx = _axis_angle_to_matrix(trl[:, 0], jnp.array([1.0, 0.0, 0.0], jnp.float32))
    Ry = _axis_angle_to_matrix(tpi[:, 0], jnp.array([0.0, 1.0, 0.0], jnp.float32))
    R_des = Y @ Rx @ Ry
    M = jnp.einsum("nki,nkj->nij", R_des, R)          # R_des^T @ R
    aem = 0.5 * (M - jnp.swapaxes(M, -1, -2))
    angle_error = jnp.stack(
        [aem[:, 2, 1], aem[:, 0, 2], jnp.zeros((n,), jnp.float32)], axis=-1)
    ard = jnp.concatenate([jnp.zeros((n, 2), jnp.float32), tyr], axis=-1)
    angular_rate_error = ang_vel - jnp.einsum("nij,nj->ni", M, ard)
    angular_acc = (-angle_error * jnp.asarray(params["gain_attitude"])
                   - angular_rate_error * jnp.asarray(params["gain_angular_rate"])
                   + jnp.cross(ang_vel, ang_vel))
    aat = jnp.concatenate([angular_acc, tt], axis=1)
    cmd = (jnp.asarray(params["mixer"]) @ aat.T).T
    cmd = cmd / jnp.asarray(params["max_thrusts"]) * 2.0 - 1.0
    return cmd.reshape(*batch_shape, -1)


def _run_case(params, key, batch_shape):
    k1, k2, k3, k4, k5, k6, k7, k8 = jax.random.split(key, 8)
    pos = jax.random.normal(k1, (*batch_shape, 3), jnp.float32)
    quat = jax.random.normal(k2, (*batch_shape, 4), jnp.float32)
    quat = quat / jnp.linalg.norm(quat, axis=-1, keepdims=True)
    vel = jax.random.normal(k3, (*batch_shape, 3), jnp.float32)
    ang_vel = 0.5 * jax.random.normal(k4, (*batch_shape, 3), jnp.float32)
    root_state = jnp.concatenate([pos, quat, vel, ang_vel], axis=-1)  # (*B, 13)

    target_thrust = (float(params["mass"]) * float(params["g"])
                     + jax.random.normal(k5, (*batch_shape, 1), jnp.float32))
    target_yaw_rate = 0.3 * jax.random.normal(k6, (*batch_shape, 1), jnp.float32)
    target_roll = 0.2 * jax.random.normal(k7, (*batch_shape, 1), jnp.float32)
    target_pitch = 0.2 * jax.random.normal(k8, (*batch_shape, 1), jnp.float32)

    cmd = attitude_controller_forward(params, root_state, target_thrust,
                                      target_yaw_rate, target_roll, target_pitch)
    cmd = jax.block_until_ready(cmd)

    ref = reference_forward(params, root_state, target_thrust,
                            target_yaw_rate, target_roll, target_pitch)
    ref = jax.block_until_ready(ref)

    assert cmd.shape == (*batch_shape, NUM_ROTORS), cmd.shape
    np.testing.assert_allclose(np.asarray(cmd), np.asarray(ref),
                               rtol=2e-3, atol=2e-3)


if __name__ == "__main__":
    params = make_params()
    key = jax.random.PRNGKey(0)
    ka, kb, kc = jax.random.split(key, 3)
    _run_case(params, ka, (2, 8))      # 16 environments (small, single tile)
    _run_case(params, kb, (5, 300))    # 1500 environments (padding path)
    _run_case(params, kc, (4, 1024))   # 4096 environments (>=2 grid steps / 2-core path)
    print("KERNEL_OK")
</pallas_src>

<mosaic_0001>
module attributes {stable_mosaic.version = 11 : i64} {
  func.func @kernel(%arg0: i32, %arg1: memref<11x16x128xf32, #tpu.memory_space<vmem>>, %arg2: memref<4x16x128xf32, #tpu.memory_space<vmem>>) attributes {dimension_semantics = [#tpu.dimension_semantics<parallel>], iteration_bounds = array<i64: 1>, scalar_prefetch = 0 : i64, scratch_operands = 0 : i64, tpu.core_type = #tpu.core_type<tc>, window_params = [{transform_indices = @transform_0, window_bounds = array<i64: 11, 16, 128>}, {transform_indices = @transform_1, window_bounds = array<i64: 4, 16, 128>}]} {
    %c0_i32 = arith.constant 0 : i32
    %c8_i32 = arith.constant 8 : i32
    %0 = arith.muli %c0_i32, %c8_i32 : i32
    %1 = tpu.assume_multiple %0, 8 : i32
    %c0 = arith.constant 0 : index
    %2 = arith.index_cast %1 : i32 to index
    %c0_0 = arith.constant 0 : index
    %3 = vector.load %arg1[%c0, %2, %c0_0] : memref<11x16x128xf32, #tpu.memory_space<vmem>>, vector<1x8x128xf32>
    %4 = vector.shape_cast %3 : vector<1x8x128xf32> to vector<8x128xf32>
    %c1 = arith.constant 1 : index
    %5 = arith.index_cast %1 : i32 to index
    %c0_1 = arith.constant 0 : index
    %6 = vector.load %arg1[%c1, %5, %c0_1] : memref<11x16x128xf32, #tpu.memory_space<vmem>>, vector<1x8x128xf32>
    %7 = vector.shape_cast %6 : vector<1x8x128xf32> to vector<8x128xf32>
    %c2 = arith.constant 2 : index
    %8 = arith.index_cast %1 : i32 to index
    %c0_2 = arith.constant 0 : index
    %9 = vector.load %arg1[%c2, %8, %c0_2] : memref<11x16x128xf32, #tpu.memory_space<vmem>>, vector<1x8x128xf32>
    %10 = vector.shape_cast %9 : vector<1x8x128xf32> to vector<8x128xf32>
    %c3 = arith.constant 3 : index
    %11 = arith.index_cast %1 : i32 to index
    %c0_3 = arith.constant 0 : index
    %12 = vector.load %arg1[%c3, %11, %c0_3] : memref<11x16x128xf32, #tpu.memory_space<vmem>>, vector<1x8x128xf32>
    %13 = vector.shape_cast %12 : vector<1x8x128xf32> to vector<8x128xf32>
    %c4 = arith.constant 4 : index
    %14 = arith.index_cast %1 : i32 to index
    %c0_4 = arith.constant 0 : index
    %15 = vector.load %arg1[%c4, %14, %c0_4] : memref<11x16x128xf32, #tpu.memory_space<vmem>>, vector<1x8x128xf32>
    %16 = vector.shape_cast %15 : vector<1x8x128xf32> to vector<8x128xf32>
    %c5 = arith.constant 5 : index
    %17 = arith.index_cast %1 : i32 to index
    %c0_5 = arith.constant 0 : index
    %18 = vector.load %arg1[%c5, %17, %c0_5] : memref<11x16x128xf32, #tpu.memory_space<vmem>>, vector<1x8x128xf32>
    %19 = vector.shape_cast %18 : vector<1x8x128xf32> to vector<8x128xf32>
    %c6 = arith.constant 6 : index
    %20 = arith.index_cast %1 : i32 to index
    %c0_6 = arith.constant 0 : index
    %21 = vector.load %arg1[%c6, %20, %c0_6] : memref<11x16x128xf32, #tpu.memory_space<vmem>>, vector<1x8x128xf32>
    %22 = vector.shape_cast %21 : vector<1x8x128xf32> to vector<8x128xf32>
    %c7 = arith.constant 7 : index
    %23 = arith.index_cast %1 : i32 to index
    %c0_7 = arith.constant 0 : index
    %24 = vector.load %arg1[%c7, %23, %c0_7] : memref<11x16x128xf32, #tpu.memory_space<vmem>>, vector<1x8x128xf32>
    %25 = vector.shape_cast %24 : vector<1x8x128xf32> to vector<8x128xf32>
    %c8 = arith.constant 8 : index
    %26 = arith.index_cast %1 : i32 to index
    %c0_8 = arith.constant 0 : index
    %27 = vector.load %arg1[%c8, %26, %c0_8] : memref<11x16x128xf32, #tpu.memory_space<vmem>>, vector<1x8x128xf32>
    %28 = vector.shape_cast %27 : vector<1x8x128xf32> to vector<8x128xf32>
    %c9 = arith.constant 9 : index
    %29 = arith.index_cast %1 : i32 to index
    %c0_9 = arith.constant 0 : index
    %30 = vector.load %arg1[%c9, %29, %c0_9] : memref<11x16x128xf32, #tpu.memory_space<vmem>>, vector<1x8x128xf32>
    %31 = vector.shape_cast %30 : vector<1x8x128xf32> to vector<8x128xf32>
    %c10 = arith.constant 10 : index
    %32 = arith.index_cast %1 : i32 to index
    %c0_10 = arith.constant 0 : index
    %33 = vector.load %arg1[%c10, %32, %c0_10] : memref<11x16x128xf32, #tpu.memory_space<vmem>>, vector<1x8x128xf32>
    %34 = vector.shape_cast %33 : vector<1x8x128xf32> to vector<8x128xf32>
    %35 = arith.mulf %4, %4 : vector<8x128xf32>
    %36 = arith.mulf %7, %7 : vector<8x128xf32>
    %37 = arith.addf %35, %36 : vector<8x128xf32>
    %38 = arith.mulf %10, %10 : vector<8x128xf32>
    %39 = arith.addf %37, %38 : vector<8x128xf32>
    %40 = arith.mulf %13, %13 : vector<8x128xf32>
    %41 = arith.addf %39, %40 : vector<8x128xf32>
    %42 = tpu.reciprocal %41 {approx = true} : vector<8x128xf32> -> vector<8x128xf32>
    %cst = arith.constant 2.000000e+00 : f32
    %43 = vector.broadcast %cst : f32 to vector<8x128xf32>
    %44 = arith.mulf %43, %42 : vector<8x128xf32>
    %45 = arith.mulf %10, %10 : vector<8x128xf32>
    %46 = arith.mulf %13, %13 : vector<8x128xf32>
    %47 = arith.addf %45, %46 : vector<8x128xf32>
    %48 = arith.mulf %44, %47 : vector<8x128xf32>
    %cst_11 = arith.constant 1.000000e+00 : f32
    %49 = vector.broadcast %cst_11 : f32 to vector<8x128xf32>
    %50 = arith.subf %49, %48 : vector<8x128xf32>
    %51 = arith.mulf %7, %10 : vector<8x128xf32>
    %52 = arith.mulf %13, %4 : vector<8x128xf32>
    %53 = arith.subf %51, %52 : vector<8x128xf32>
    %54 = arith.mulf %44, %53 : vector<8x128xf32>
    %55 = arith.mulf %7, %13 : vector<8x128xf32>
    %56 = arith.mulf %10, %4 : vector<8x128xf32>
    %57 = arith.addf %55, %56 : vector<8x128xf32>
    %58 = arith.mulf %44, %57 : vector<8x128xf32>
    %59 = arith.mulf %7, %10 : vector<8x128xf32>
    %60 = arith.mulf %13, %4 : vector<8x128xf32>
    %61 = arith.addf %59, %60 : vector<8x128xf32>
    %62 = arith.mulf %44, %61 : vector<8x128xf32>
    %63 = arith.mulf %7, %7 : vector<8x128xf32>
    %64 = arith.mulf %13, %13 : vector<8x128xf32>
    %65 = arith.addf %63, %64 : vector<8x128xf32>
    %66 = arith.mulf %44, %65 : vector<8x128xf32>
    %cst_12 = arith.constant 1.000000e+00 : f32
    %67 = vector.broadcast %cst_12 : f32 to vector<8x128xf32>
    %68 = arith.subf %67, %66 : vector<8x128xf32>
    %69 = arith.mulf %10, %13 : vector<8x128xf32>
    %70 = arith.mulf %7, %4 : vector<8x128xf32>
    %71 = arith.subf %69, %70 : vector<8x128xf32>
    %72 = arith.mulf %44, %71 : vector<8x128xf32>
    %73 = arith.mulf %7, %13 : vector<8x128xf32>
    %74 = arith.mulf %10, %4 : vector<8x128xf32>
    %75 = arith.subf %73, %74 : vector<8x128xf32>
    %76 = arith.mulf %44, %75 : vector<8x128xf32>
    %77 = arith.mulf %10, %13 : vector<8x128xf32>
    %78 = arith.mulf %7, %4 : vector<8x128xf32>
    %79 = arith.addf %77, %78 : vector<8x128xf32>
    %80 = arith.mulf %44, %79 : vector<8x128xf32>
    %81 = arith.mulf %7, %7 : vector<8x128xf32>
    %82 = arith.mulf %10, %10 : vector<8x128xf32>
    %83 = arith.addf %81, %82 : vector<8x128xf32>
    %84 = arith.mulf %44, %83 : vector<8x128xf32>
    %cst_13 = arith.constant 1.000000e+00 : f32
    %85 = vector.broadcast %cst_13 : f32 to vector<8x128xf32>
    %86 = arith.subf %85, %84 : vector<8x128xf32>
    %87 = arith.mulf %50, %50 : vector<8x128xf32>
    %88 = arith.mulf %62, %62 : vector<8x128xf32>
    %89 = arith.addf %87, %88 : vector<8x128xf32>
    %cst_14 = arith.constant 9.99999996E-13 : f32
    %90 = vector.broadcast %cst_14 : f32 to vector<8x128xf32>
    %91 = arith.cmpf ogt, %89, %90 : vector<8x128xf32>
    %cst_15 = arith.constant 1.000000e+00 : f32
    %92 = vector.broadcast %cst_15 : f32 to vector<8x128xf32>
    %93 = arith.select %91, %89, %92 : vector<8x128xi1>, vector<8x128xf32>
    %94 = math.rsqrt %93 : vector<8x128xf32>
    %95 = arith.mulf %50, %94 : vector<8x128xf32>
    %cst_16 = arith.constant 1.000000e+00 : f32
    %96 = vector.broadcast %cst_16 : f32 to vector<8x128xf32>
    %97 = arith.select %91, %95, %96 : vector<8x128xi1>, vector<8x128xf32>
    %98 = arith.mulf %62, %94 : vector<8x128xf32>
    %cst_17 = arith.constant 0.000000e+00 : f32
    %99 = vector.broadcast %cst_17 : f32 to vector<8x128xf32>
    %100 = arith.select %91, %98, %99 : vector<8x128xi1>, vector<8x128xf32>
    %101 = math.cos %31 : vector<8x128xf32>
    %102 = math.sin %31 : vector<8x128xf32>
    %103 = math.cos %34 : vector<8x128xf32>
    %104 = math.sin %34 : vector<8x128xf32>
    %105 = arith.mulf %97, %103 : vector<8x128xf32>
    %106 = arith.mulf %100, %102 : vector<8x128xf32>
    %107 = arith.mulf %106, %104 : vector<8x128xf32>
    %108 = arith.subf %105, %107 : vector<8x128xf32>
    %cst_18 = arith.constant 0.000000e+00 : f32
    %109 = vector.broadcast %cst_18 : f32 to vector<8x128xf32>
    %110 = arith.subf %109, %100 : vector<8x128xf32>
    %111 = arith.mulf %110, %101 : vector<8x128xf32>
    %112 = arith.mulf %97, %104 : vector<8x128xf32>
    %113 = arith.mulf %100, %102 : vector<8x128xf32>
    %114 = arith.mulf %113, %103 : vector<8x128xf32>
    %115 = arith.addf %112, %114 : vector<8x128xf32>
    %116 = arith.mulf %100, %103 : vector<8x128xf32>
    %117 = arith.mulf %97, %102 : vector<8x128xf32>
    %118 = arith.mulf %117, %104 : vector<8x128xf32>
    %119 = arith.addf %116, %118 : vector<8x128xf32>
    %120 = arith.mulf %97, %101 : vector<8x128xf32>
    %121 = arith.mulf %100, %104 : vector<8x128xf32>
    %122 = arith.mulf %97, %102 : vector<8x128xf32>
    %123 = arith.mulf %122, %103 : vector<8x128xf32>
    %124 = arith.subf %121, %123 : vector<8x128xf32>
    %cst_19 = arith.constant 0.000000e+00 : f32
    %125 = vector.broadcast %cst_19 : f32 to vector<8x128xf32>
    %126 = arith.subf %125, %101 : vector<8x128xf32>
    %127 = arith.mulf %126, %104 : vector<8x128xf32>
    %128 = arith.mulf %101, %103 : vector<8x128xf32>
    %129 = arith.mulf %108, %58 : vector<8x128xf32>
    %130 = arith.mulf %119, %72 : vector<8x128xf32>
    %131 = arith.addf %129, %130 : vector<8x128xf32>
    %132 = arith.mulf %127, %86 : vector<8x128xf32>
    %133 = arith.addf %131, %132 : vector<8x128xf32>
    %134 = arith.mulf %111, %58 : vector<8x128xf32>
    %135 = arith.mulf %120, %72 : vector<8x128xf32>
    %136 = arith.addf %134, %135 : vector<8x128xf32>
    %137 = arith.mulf %102, %86 : vector<8x128xf32>
    %138 = arith.addf %136, %137 : vector<8x128xf32>
    %139 = arith.mulf %115, %58 : vector<8x128xf32>
    %140 = arith.mulf %124, %72 : vector<8x128xf32>
    %141 = arith.addf %139, %140 : vector<8x128xf32>
    %142 = arith.mulf %128, %86 : vector<8x128xf32>
    %143 = arith.addf %141, %142 : vector<8x128xf32>
    %144 = arith.mulf %115, %50 : vector<8x128xf32>
    %145 = arith.mulf %124, %62 : vector<8x128xf32>
    %146 = arith.addf %144, %145 : vector<8x128xf32>
    %147 = arith.mulf %128, %76 : vector<8x128xf32>
    %148 = arith.addf %146, %147 : vector<8x128xf32>
    %149 = arith.mulf %115, %54 : vector<8x128xf32>
    %150 = arith.mulf %124, %68 : vector<8x128xf32>
    %151 = arith.addf %149, %150 : vector<8x128xf32>
    %152 = arith.mulf %128, %80 : vector<8x128xf32>
    %153 = arith.addf %151, %152 : vector<8x128xf32>
    %154 = arith.subf %153, %138 : vector<8x128xf32>
    %cst_20 = arith.constant 5.000000e-01 : f32
    %155 = vector.broadcast %cst_20 : f32 to vector<8x128xf32>
    %156 = arith.mulf %155, %154 : vector<8x128xf32>
    %157 = arith.subf %133, %148 : vector<8x128xf32>
    %cst_21 = arith.constant 5.000000e-01 : f32
    %158 = vector.broadcast %cst_21 : f32 to vector<8x128xf32>
    %159 = arith.mulf %158, %157 : vector<8x128xf32>
    %160 = arith.mulf %133, %28 : vector<8x128xf32>
    %161 = arith.subf %16, %160 : vector<8x128xf32>
    %162 = arith.mulf %138, %28 : vector<8x128xf32>
    %163 = arith.subf %19, %162 : vector<8x128xf32>
    %164 = arith.mulf %143, %28 : vector<8x128xf32>
    %165 = arith.subf %22, %164 : vector<8x128xf32>
    %cst_22 = arith.constant 0.000000e+00 : f32
    %166 = vector.broadcast %cst_22 : f32 to vector<8x128xf32>
    %167 = arith.subf %166, %156 : vector<8x128xf32>
    %cst_23 = arith.constant 428.571442 : f32
    %168 = vector.broadcast %cst_23 : f32 to vector<8x128xf32>
    %169 = arith.mulf %167, %168 : vector<8x128xf32>
    %cst_24 = arith.constant 74.2857132 : f32
    %170 = vector.broadcast %cst_24 : f32 to vector<8x128xf32>
    %171 = arith.mulf %161, %170 : vector<8x128xf32>
    %172 = arith.subf %169, %171 : vector<8x128xf32>
    %cst_25 = arith.constant 0.000000e+00 : f32
    %173 = vector.broadcast %cst_25 : f32 to vector<8x128xf32>
    %174 = arith.subf %173, %159 : vector<8x128xf32>
    %cst_26 = arith.constant 428.571442 : f32
    %175 = vector.broadcast %cst_26 : f32 to vector<8x128xf32>
    %176 = arith.mulf %174, %175 : vector<8x128xf32>
    %cst_27 = arith.constant 74.2857132 : f32
    %177 = vector.broadcast %cst_27 : f32 to vector<8x128xf32>
    %178 = arith.mulf %163, %177 : vector<8x128xf32>
    %179 = arith.subf %176, %178 : vector<8x128xf32>
    %cst_28 = arith.constant 0.000000e+00 : f32
    %180 = vector.broadcast %cst_28 : f32 to vector<8x128xf32>
    %181 = arith.subf %180, %165 : vector<8x128xf32>
    %cst_29 = arith.constant 2.08333325 : f32
    %182 = vector.broadcast %cst_29 : f32 to vector<8x128xf32>
    %183 = arith.mulf %181, %182 : vector<8x128xf32>
    %cst_30 = arith.constant 0.00485011563 : f32
    %184 = vector.broadcast %cst_30 : f32 to vector<8x128xf32>
    %185 = arith.mulf %172, %184 : vector<8x128xf32>
    %cst_31 = arith.constant -0.00485011563 : f32
    %186 = vector.broadcast %cst_31 : f32 to vector<8x128xf32>
    %187 = arith.mulf %179, %186 : vector<8x128xf32>
    %188 = arith.addf %185, %187 : vector<8x128xf32>
    %cst_32 = arith.constant -5.34002425E-7 : f32
    %189 = vector.broadcast %cst_32 : f32 to vector<8x128xf32>
    %190 = arith.mulf %183, %189 : vector<8x128xf32>
    %191 = arith.addf %188, %190 : vector<8x128xf32>
    %cst_33 = arith.constant 0.0832890644 : f32
    %192 = vector.broadcast %cst_33 : f32 to vector<8x128xf32>
    %193 = arith.mulf %25, %192 : vector<8x128xf32>
    %194 = arith.addf %191, %193 : vector<8x128xf32>
    %cst_34 = arith.constant 1.000000e+00 : f32
    %195 = vector.broadcast %cst_34 : f32 to vector<8x128xf32>
    %196 = arith.subf %194, %195 : vector<8x128xf32>
    %c0_35 = arith.constant 0 : index
    %197 = arith.index_cast %1 : i32 to index
    %c0_36 = arith.constant 0 : index
    %198 = vector.load %arg2[%c0_35, %197, %c0_36] : memref<4x16x128xf32, #tpu.memory_space<vmem>>, vector<1x8x128xf32>
    %199 = vector.shape_cast %198 : vector<1x8x128xf32> to vector<8x128xf32>
    %200 = vector.shape_cast %196 : vector<8x128xf32> to vector<1x8x128xf32>
    tpu.vector_store %arg2[%c0_35, %197, %c0_36], %200 {strides = array<i32>} : memref<4x16x128xf32, #tpu.memory_space<vmem>>, vector<1x8x128xf32>,
    %cst_37 = arith.constant 0.00485011563 : f32
    %201 = vector.broadcast %cst_37 : f32 to vector<8x128xf32>
    %202 = arith.mulf %172, %201 : vector<8x128xf32>
    %cst_38 = arith.constant 0.00485011563 : f32
    %203 = vector.broadcast %cst_38 : f32 to vector<8x128xf32>
    %204 = arith.mulf %179, %203 : vector<8x128xf32>
    %205 = arith.addf %202, %204 : vector<8x128xf32>
    %cst_39 = arith.constant 5.34002425E-7 : f32
    %206 = vector.broadcast %cst_39 : f32 to vector<8x128xf32>
    %207 = arith.mulf %183, %206 : vector<8x128xf32>
    %208 = arith.addf %205, %207 : vector<8x128xf32>
    %cst_40 = arith.constant 0.0832890644 : f32
    %209 = vector.broadcast %cst_40 : f32 to vector<8x128xf32>
    %210 = arith.mulf %25, %209 : vector<8x128xf32>
    %211 = arith.addf %208, %210 : vector<8x128xf32>
    %cst_41 = arith.constant 1.000000e+00 : f32
    %212 = vector.broadcast %cst_41 : f32 to vector<8x128xf32>
    %213 = arith.subf %211, %212 : vector<8x128xf32>
    %c1_42 = arith.constant 1 : index
    %214 = arith.index_cast %1 : i32 to index
    %c0_43 = arith.constant 0 : index
    %215 = vector.load %arg2[%c1_42, %214, %c0_43] : memref<4x16x128xf32, #tpu.memory_space<vmem>>, vector<1x8x128xf32>
    %216 = vector.shape_cast %215 : vector<1x8x128xf32> to vector<8x128xf32>
    %217 = vector.shape_cast %213 : vector<8x128xf32> to vector<1x8x128xf32>
    tpu.vector_store %arg2[%c1_42, %214, %c0_43], %217 {strides = array<i32>} : memref<4x16x128xf32, #tpu.memory_space<vmem>>, vector<1x8x128xf32>,
    %cst_44 = arith.constant -0.00485011563 : f32
    %218 = vector.broadcast %cst_44 : f32 to vector<8x128xf32>
    %219 = arith.mulf %172, %218 : vector<8x128xf32>
    %cst_45 = arith.constant 0.00485011563 : f32
    %220 = vector.broadcast %cst_45 : f32 to vector<8x128xf32>
    %221 = arith.mulf %179, %220 : vector<8x128xf32>
    %222 = arith.addf %219, %221 : vector<8x128xf32>
    %cst_46 = arith.constant -5.34002425E-7 : f32
    %223 = vector.broadcast %cst_46 : f32 to vector<8x128xf32>
    %224 = arith.mulf %183, %223 : vector<8x128xf32>
    %225 = arith.addf %222, %224 : vector<8x128xf32>
    %cst_47 = arith.constant 0.0832890644 : f32
    %226 = vector.broadcast %cst_47 : f32 to vector<8x128xf32>
    %227 = arith.mulf %25, %226 : vector<8x128xf32>
    %228 = arith.addf %225, %227 : vector<8x128xf32>
    %cst_48 = arith.constant 1.000000e+00 : f32
    %229 = vector.broadcast %cst_48 : f32 to vector<8x128xf32>
    %230 = arith.subf %228, %229 : vector<8x128xf32>
    %c2_49 = arith.constant 2 : index
    %231 = arith.index_cast %1 : i32 to index
    %c0_50 = arith.constant 0 : index
    %232 = vector.load %arg2[%c2_49, %231, %c0_50] : memref<4x16x128xf32, #tpu.memory_space<vmem>>, vector<1x8x128xf32>
    %233 = vector.shape_cast %232 : vector<1x8x128xf32> to vector<8x128xf32>
    %234 = vector.shape_cast %230 : vector<8x128xf32> to vector<1x8x128xf32>
    tpu.vector_store %arg2[%c2_49, %231, %c0_50], %234 {strides = array<i32>} : memref<4x16x128xf32, #tpu.memory_space<vmem>>, vector<1x8x128xf32>,
    %cst_51 = arith.constant -0.00485011563 : f32
    %235 = vector.broadcast %cst_51 : f32 to vector<8x128xf32>
    %236 = arith.mulf %172, %235 : vector<8x128xf32>
    %cst_52 = arith.constant -0.00485011563 : f32
    %237 = vector.broadcast %cst_52 : f32 to vector<8x128xf32>
    %238 = arith.mulf %179, %237 : vector<8x128xf32>
    %239 = arith.addf %236, %238 : vector<8x128xf32>
    %cst_53 = arith.constant 5.34002425E-7 : f32
    %240 = vector.broadcast %cst_53 : f32 to vector<8x128xf32>
    %241 = arith.mulf %183, %240 : vector<8x128xf32>
    %242 = arith.addf %239, %241 : vector<8x128xf32>
    %cst_54 = arith.constant 0.0832890644 : f32
    %243 = vector.broadcast %cst_54 : f32 to vector<8x128xf32>
    %244 = arith.mulf %25, %243 : vector<8x128xf32>
    %245 = arith.addf %242, %244 : vector<8x128xf32>
    %cst_55 = arith.constant 1.000000e+00 : f32
    %246 = vector.broadcast %cst_55 : f32 to vector<8x128xf32>
    %247 = arith.subf %245, %246 : vector<8x128xf32>
    %c3_56 = arith.constant 3 : index
    %248 = arith.index_cast %1 : i32 to index
    %c0_57 = arith.constant 0 : index
    %249 = vector.load %arg2[%c3_56, %248, %c0_57] : memref<4x16x128xf32, #tpu.memory_space<vmem>>, vector<1x8x128xf32>
    %250 = vector.shape_cast %249 : vector<1x8x128xf32> to vector<8x128xf32>
    %251 = vector.shape_cast %247 : vector<8x128xf32> to vector<1x8x128xf32>
    tpu.vector_store %arg2[%c3_56, %248, %c0_57], %251 {strides = array<i32>} : memref<4x16x128xf32, #tpu.memory_space<vmem>>, vector<1x8x128xf32>,
    %c1_i32 = arith.constant 1 : i32
    %c8_i32_58 = arith.constant 8 : i32
    %252 = arith.muli %c1_i32, %c8_i32_58 : i32
    %253 = tpu.assume_multiple %252, 8 : i32
    %c0_59 = arith.constant 0 : index
    %254 = arith.index_cast %253 : i32 to index
    %c0_60 = arith.constant 0 : index
    %255 = vector.load %arg1[%c0_59, %254, %c0_60] : memref<11x16x128xf32, #tpu.memory_space<vmem>>, vector<1x8x128xf32>
    %256 = vector.shape_cast %255 : vector<1x8x128xf32> to vector<8x128xf32>
    %c1_61 = arith.constant 1 : index
    %257 = arith.index_cast %253 : i32 to index
    %c0_62 = arith.constant 0 : index
    %258 = vector.load %arg1[%c1_61, %257, %c0_62] : memref<11x16x128xf32, #tpu.memory_space<vmem>>, vector<1x8x128xf32>
    %259 = vector.shape_cast %258 : vector<1x8x128xf32> to vector<8x128xf32>
    %c2_63 = arith.constant 2 : index
    %260 = arith.index_cast %253 : i32 to index
    %c0_64 = arith.constant 0 : index
    %261 = vector.load %arg1[%c2_63, %260, %c0_64] : memref<11x16x128xf32, #tpu.memory_space<vmem>>, vector<1x8x128xf32>
    %262 = vector.shape_cast %261 : vector<1x8x128xf32> to vector<8x128xf32>
    %c3_65 = arith.constant 3 : index
    %263 = arith.index_cast %253 : i32 to index
    %c0_66 = arith.constant 0 : index
    %264 = vector.load %arg1[%c3_65, %263, %c0_66] : memref<11x16x128xf32, #tpu.memory_space<vmem>>, vector<1x8x128xf32>
    %265 = vector.shape_cast %264 : vector<1x8x128xf32> to vector<8x128xf32>
    %c4_67 = arith.constant 4 : index
    %266 = arith.index_cast %253 : i32 to index
    %c0_68 = arith.constant 0 : index
    %267 = vector.load %arg1[%c4_67, %266, %c0_68] : memref<11x16x128xf32, #tpu.memory_space<vmem>>, vector<1x8x128xf32>
    %268 = vector.shape_cast %267 : vector<1x8x128xf32> to vector<8x128xf32>
    %c5_69 = arith.constant 5 : index
    %269 = arith.index_cast %253 : i32 to index
    %c0_70 = arith.constant 0 : index
    %270 = vector.load %arg1[%c5_69, %269, %c0_70] : memref<11x16x128xf32, #tpu.memory_space<vmem>>, vector<1x8x128xf32>
    %271 = vector.shape_cast %270 : vector<1x8x128xf32> to vector<8x128xf32>
    %c6_71 = arith.constant 6 : index
    %272 = arith.index_cast %253 : i32 to index
    %c0_72 = arith.constant 0 : index
    %273 = vector.load %arg1[%c6_71, %272, %c0_72] : memref<11x16x128xf32, #tpu.memory_space<vmem>>, vector<1x8x128xf32>
    %274 = vector.shape_cast %273 : vector<1x8x128xf32> to vector<8x128xf32>
    %c7_73 = arith.constant 7 : index
    %275 = arith.index_cast %253 : i32 to index
    %c0_74 = arith.constant 0 : index
    %276 = vector.load %arg1[%c7_73, %275, %c0_74] : memref<11x16x128xf32, #tpu.memory_space<vmem>>, vector<1x8x128xf32>
    %277 = vector.shape_cast %276 : vector<1x8x128xf32> to vector<8x128xf32>
    %c8_75 = arith.constant 8 : index
    %278 = arith.index_cast %253 : i32 to index
    %c0_76 = arith.constant 0 : index
    %279 = vector.load %arg1[%c8_75, %278, %c0_76] : memref<11x16x128xf32, #tpu.memory_space<vmem>>, vector<1x8x128xf32>
    %280 = vector.shape_cast %279 : vector<1x8x128xf32> to vector<8x128xf32>
    %c9_77 = arith.constant 9 : index
    %281 = arith.index_cast %253 : i32 to index
    %c0_78 = arith.constant 0 : index
    %282 = vector.load %arg1[%c9_77, %281, %c0_78] : memref<11x16x128xf32, #tpu.memory_space<vmem>>, vector<1x8x128xf32>
    %283 = vector.shape_cast %282 : vector<1x8x128xf32> to vector<8x128xf32>
    %c10_79 = arith.constant 10 : index
    %284 = arith.index_cast %253 : i32 to index
    %c0_80 = arith.constant 0 : index
    %285 = vector.load %arg1[%c10_79, %284, %c0_80] : memref<11x16x128xf32, #tpu.memory_space<vmem>>, vector<1x8x128xf32>
    %286 = vector.shape_cast %285 : vector<1x8x128xf32> to vector<8x128xf32>
    %287 = arith.mulf %256, %256 : vector<8x128xf32>
    %288 = arith.mulf %259, %259 : vector<8x128xf32>
    %289 = arith.addf %287, %288 : vector<8x128xf32>
    %290 = arith.mulf %262, %262 : vector<8x128xf32>
    %291 = arith.addf %289, %290 : vector<8x128xf32>
    %292 = arith.mulf %265, %265 : vector<8x128xf32>
    %293 = arith.addf %291, %292 : vector<8x128xf32>
    %294 = tpu.reciprocal %293 {approx = true} : vector<8x128xf32> -> vector<8x128xf32>
    %cst_81 = arith.constant 2.000000e+00 : f32
    %295 = vector.broadcast %cst_81 : f32 to vector<8x128xf32>
    %296 = arith.mulf %295, %294 : vector<8x128xf32>
    %297 = arith.mulf %262, %262 : vector<8x128xf32>
    %298 = arith.mulf %265, %265 : vector<8x128xf32>
    %299 = arith.addf %297, %298 : vector<8x128xf32>
    %300 = arith.mulf %296, %299 : vector<8x128xf32>
    %cst_82 = arith.constant 1.000000e+00 : f32
    %301 = vector.broadcast %cst_82 : f32 to vector<8x128xf32>
    %302 = arith.subf %301, %300 : vector<8x128xf32>
    %303 = arith.mulf %259, %262 : vector<8x128xf32>
    %304 = arith.mulf %265, %256 : vector<8x128xf32>
    %305 = arith.subf %303, %304 : vector<8x128xf32>
    %306 = arith.mulf %296, %305 : vector<8x128xf32>
    %307 = arith.mulf %259, %265 : vector<8x128xf32>
    %308 = arith.mulf %262, %256 : vector<8x128xf32>
    %309 = arith.addf %307, %308 : vector<8x128xf32>
    %310 = arith.mulf %296, %309 : vector<8x128xf32>
    %311 = arith.mulf %259, %262 : vector<8x128xf32>
    %312 = arith.mulf %265, %256 : vector<8x128xf32>
    %313 = arith.addf %311, %312 : vector<8x128xf32>
    %314 = arith.mulf %296, %313 : vector<8x128xf32>
    %315 = arith.mulf %259, %259 : vector<8x128xf32>
    %316 = arith.mulf %265, %265 : vector<8x128xf32>
    %317 = arith.addf %315, %316 : vector<8x128xf32>
    %318 = arith.mulf %296, %317 : vector<8x128xf32>
    %cst_83 = arith.constant 1.000000e+00 : f32
    %319 = vector.broadcast %cst_83 : f32 to vector<8x128xf32>
    %320 = arith.subf %319, %318 : vector<8x128xf32>
    %321 = arith.mulf %262, %265 : vector<8x128xf32>
    %322 = arith.mulf %259, %256 : vector<8x128xf32>
    %323 = arith.subf %321, %322 : vector<8x128xf32>
    %324 = arith.mulf %296, %323 : vector<8x128xf32>
    %325 = arith.mulf %259, %265 : vector<8x128xf32>
    %326 = arith.mulf %262, %256 : vector<8x128xf32>
    %327 = arith.subf %325, %326 : vector<8x128xf32>
    %328 = arith.mulf %296, %327 : vector<8x128xf32>
    %329 = arith.mulf %262, %265 : vector<8x128xf32>
    %330 = arith.mulf %259, %256 : vector<8x128xf32>
    %331 = arith.addf %329, %330 : vector<8x128xf32>
    %332 = arith.mulf %296, %331 : vector<8x128xf32>
    %333 = arith.mulf %259, %259 : vector<8x128xf32>
    %334 = arith.mulf %262, %262 : vector<8x128xf32>
    %335 = arith.addf %333, %334 : vector<8x128xf32>
    %336 = arith.mulf %296, %335 : vector<8x128xf32>
    %cst_84 = arith.constant 1.000000e+00 : f32
    %337 = vector.broadcast %cst_84 : f32 to vector<8x128xf32>
    %338 = arith.subf %337, %336 : vector<8x128xf32>
    %339 = arith.mulf %302, %302 : vector<8x128xf32>
    %340 = arith.mulf %314, %314 : vector<8x128xf32>
    %341 = arith.addf %339, %340 : vector<8x128xf32>
    %cst_85 = arith.constant 9.99999996E-13 : f32
    %342 = vector.broadcast %cst_85 : f32 to vector<8x128xf32>
    %343 = arith.cmpf ogt, %341, %342 : vector<8x128xf32>
    %cst_86 = arith.constant 1.000000e+00 : f32
    %344 = vector.broadcast %cst_86 : f32 to vector<8x128xf32>
    %345 = arith.select %343, %341, %344 : vector<8x128xi1>, vector<8x128xf32>
    %346 = math.rsqrt %345 : vector<8x128xf32>
    %347 = arith.mulf %302, %346 : vector<8x128xf32>
    %cst_87 = arith.constant 1.000000e+00 : f32
    %348 = vector.broadcast %cst_87 : f32 to vector<8x128xf32>
    %349 = arith.select %343, %347, %348 : vector<8x128xi1>, vector<8x128xf32>
    %350 = arith.mulf %314, %346 : vector<8x128xf32>
    %cst_88 = arith.constant 0.000000e+00 : f32
    %351 = vector.broadcast %cst_88 : f32 to vector<8x128xf32>
    %352 = arith.select %343, %350, %351 : vector<8x128xi1>, vector<8x128xf32>
    %353 = math.cos %283 : vector<8x128xf32>
    %354 = math.sin %283 : vector<8x128xf32>
    %355 = math.cos %286 : vector<8x128xf32>
    %356 = math.sin %286 : vector<8x128xf32>
    %357 = arith.mulf %349, %355 : vector<8x128xf32>
    %358 = arith.mulf %352, %354 : vector<8x128xf32>
    %359 = arith.mulf %358, %356 : vector<8x128xf32>
    %360 = arith.subf %357, %359 : vector<8x128xf32>
    %cst_89 = arith.constant 0.000000e+00 : f32
    %361 = vector.broadcast %cst_89 : f32 to vector<8x128xf32>
    %362 = arith.subf %361, %352 : vector<8x128xf32>
    %363 = arith.mulf %362, %353 : vector<8x128xf32>
    %364 = arith.mulf %349, %356 : vector<8x128xf32>
    %365 = arith.mulf %352, %354 : vector<8x128xf32>
    %366 = arith.mulf %365, %355 : vector<8x128xf32>
    %367 = arith.addf %364, %366 : vector<8x128xf32>
    %368 = arith.mulf %352, %355 : vector<8x128xf32>
    %369 = arith.mulf %349, %354 : vector<8x128xf32>
    %370 = arith.mulf %369, %356 : vector<8x128xf32>
    %371 = arith.addf %368, %370 : vector<8x128xf32>
    %372 = arith.mulf %349, %353 : vector<8x128xf32>
    %373 = arith.mulf %352, %356 : vector<8x128xf32>
    %374 = arith.mulf %349, %354 : vector<8x128xf32>
    %375 = arith.mulf %374, %355 : vector<8x128xf32>
    %376 = arith.subf %373, %375 : vector<8x128xf32>
    %cst_90 = arith.constant 0.000000e+00 : f32
    %377 = vector.broadcast %cst_90 : f32 to vector<8x128xf32>
    %378 = arith.subf %377, %353 : vector<8x128xf32>
    %379 = arith.mulf %378, %356 : vector<8x128xf32>
    %380 = arith.mulf %353, %355 : vector<8x128xf32>
    %381 = arith.mulf %360, %310 : vector<8x128xf32>
    %382 = arith.mulf %371, %324 : vector<8x128xf32>
    %383 = arith.addf %381, %382 : vector<8x128xf32>
    %384 = arith.mulf %379, %338 : vector<8x128xf32>
    %385 = arith.addf %383, %384 : vector<8x128xf32>
    %386 = arith.mulf %363, %310 : vector<8x128xf32>
    %387 = arith.mulf %372, %324 : vector<8x128xf32>
    %388 = arith.addf %386, %387 : vector<8x128xf32>
    %389 = arith.mulf %354, %338 : vector<8x128xf32>
    %390 = arith.addf %388, %389 : vector<8x128xf32>
    %391 = arith.mulf %367, %310 : vector<8x128xf32>
    %392 = arith.mulf %376, %324 : vector<8x128xf32>
    %393 = arith.addf %391, %392 : vector<8x128xf32>
    %394 = arith.mulf %380, %338 : vector<8x128xf32>
    %395 = arith.addf %393, %394 : vector<8x128xf32>
    %396 = arith.mulf %367, %302 : vector<8x128xf32>
    %397 = arith.mulf %376, %314 : vector<8x128xf32>
    %398 = arith.addf %396, %397 : vector<8x128xf32>
    %399 = arith.mulf %380, %328 : vector<8x128xf32>
    %400 = arith.addf %398, %399 : vector<8x128xf32>
    %401 = arith.mulf %367, %306 : vector<8x128xf32>
    %402 = arith.mulf %376, %320 : vector<8x128xf32>
    %403 = arith.addf %401, %402 : vector<8x128xf32>
    %404 = arith.mulf %380, %332 : vector<8x128xf32>
    %405 = arith.addf %403, %404 : vector<8x128xf32>
    %406 = arith.subf %405, %390 : vector<8x128xf32>
    %cst_91 = arith.constant 5.000000e-01 : f32
    %407 = vector.broadcast %cst_91 : f32 to vector<8x128xf32>
    %408 = arith.mulf %407, %406 : vector<8x128xf32>
    %409 = arith.subf %385, %400 : vector<8x128xf32>
    %cst_92 = arith.constant 5.000000e-01 : f32
    %410 = vector.broadcast %cst_92 : f32 to vector<8x128xf32>
    %411 = arith.mulf %410, %409 : vector<8x128xf32>
    %412 = arith.mulf %385, %280 : vector<8x128xf32>
    %413 = arith.subf %268, %412 : vector<8x128xf32>
    %414 = arith.mulf %390, %280 : vector<8x128xf32>
    %415 = arith.subf %271, %414 : vector<8x128xf32>
    %416 = arith.mulf %395, %280 : vector<8x128xf32>
    %417 = arith.subf %274, %416 : vector<8x128xf32>
    %cst_93 = arith.constant 0.000000e+00 : f32
    %418 = vector.broadcast %cst_93 : f32 to vector<8x128xf32>
    %419 = arith.subf %418, %408 : vector<8x128xf32>
    %cst_94 = arith.constant 428.571442 : f32
    %420 = vector.broadcast %cst_94 : f32 to vector<8x128xf32>
    %421 = arith.mulf %419, %420 : vector<8x128xf32>
    %cst_95 = arith.constant 74.2857132 : f32
    %422 = vector.broadcast %cst_95 : f32 to vector<8x128xf32>
    %423 = arith.mulf %413, %422 : vector<8x128xf32>
    %424 = arith.subf %421, %423 : vector<8x128xf32>
    %cst_96 = arith.constant 0.000000e+00 : f32
    %425 = vector.broadcast %cst_96 : f32 to vector<8x128xf32>
    %426 = arith.subf %425, %411 : vector<8x128xf32>
    %cst_97 = arith.constant 428.571442 : f32
    %427 = vector.broadcast %cst_97 : f32 to vector<8x128xf32>
    %428 = arith.mulf %426, %427 : vector<8x128xf32>
    %cst_98 = arith.constant 74.2857132 : f32
    %429 = vector.broadcast %cst_98 : f32 to vector<8x128xf32>
    %430 = arith.mulf %415, %429 : vector<8x128xf32>
    %431 = arith.subf %428, %430 : vector<8x128xf32>
    %cst_99 = arith.constant 0.000000e+00 : f32
    %432 = vector.broadcast %cst_99 : f32 to vector<8x128xf32>
    %433 = arith.subf %432, %417 : vector<8x128xf32>
    %cst_100 = arith.constant 2.08333325 : f32
    %434 = vector.broadcast %cst_100 : f32 to vector<8x128xf32>
    %435 = arith.mulf %433, %434 : vector<8x128xf32>
    %cst_101 = arith.constant 0.00485011563 : f32
    %436 = vector.broadcast %cst_101 : f32 to vector<8x128xf32>
    %437 = arith.mulf %424, %436 : vector<8x128xf32>
    %cst_102 = arith.constant -0.00485011563 : f32
    %438 = vector.broadcast %cst_102 : f32 to vector<8x128xf32>
    %439 = arith.mulf %431, %438 : vector<8x128xf32>
    %440 = arith.addf %437, %439 : vector<8x128xf32>
    %cst_103 = arith.constant -5.34002425E-7 : f32
    %441 = vector.broadcast %cst_103 : f32 to vector<8x128xf32>
    %442 = arith.mulf %435, %441 : vector<8x128xf32>
    %443 = arith.addf %440, %442 : vector<8x128xf32>
    %cst_104 = arith.constant 0.0832890644 : f32
    %444 = vector.broadcast %cst_104 : f32 to vector<8x128xf32>
    %445 = arith.mulf %277, %444 : vector<8x128xf32>
    %446 = arith.addf %443, %445 : vector<8x128xf32>
    %cst_105 = arith.constant 1.000000e+00 : f32
    %447 = vector.broadcast %cst_105 : f32 to vector<8x128xf32>
    %448 = arith.subf %446, %447 : vector<8x128xf32>
    %c0_106 = arith.constant 0 : index
    %449 = arith.index_cast %253 : i32 to index
    %c0_107 = arith.constant 0 : index
    %450 = vector.load %arg2[%c0_106, %449, %c0_107] : memref<4x16x128xf32, #tpu.memory_space<vmem>>, vector<1x8x128xf32>
    %451 = vector.shape_cast %450 : vector<1x8x128xf32> to vector<8x128xf32>
    %452 = vector.shape_cast %448 : vector<8x128xf32> to vector<1x8x128xf32>
    tpu.vector_store %arg2[%c0_106, %449, %c0_107], %452 {strides = array<i32>} : memref<4x16x128xf32, #tpu.memory_space<vmem>>, vector<1x8x128xf32>,
    %cst_108 = arith.constant 0.00485011563 : f32
    %453 = vector.broadcast %cst_108 : f32 to vector<8x128xf32>
    %454 = arith.mulf %424, %453 : vector<8x128xf32>
    %cst_109 = arith.constant 0.00485011563 : f32
    %455 = vector.broadcast %cst_109 : f32 to vector<8x128xf32>
    %456 = arith.mulf %431, %455 : vector<8x128xf32>
    %457 = arith.addf %454, %456 : vector<8x128xf32>
    %cst_110 = arith.constant 5.34002425E-7 : f32
    %458 = vector.broadcast %cst_110 : f32 to vector<8x128xf32>
    %459 = arith.mulf %435, %458 : vector<8x128xf32>
    %460 = arith.addf %457, %459 : vector<8x128xf32>
    %cst_111 = arith.constant 0.0832890644 : f32
    %461 = vector.broadcast %cst_111 : f32 to vector<8x128xf32>
    %462 = arith.mulf %277, %461 : vector<8x128xf32>
    %463 = arith.addf %460, %462 : vector<8x128xf32>
    %cst_112 = arith.constant 1.000000e+00 : f32
    %464 = vector.broadcast %cst_112 : f32 to vector<8x128xf32>
    %465 = arith.subf %463, %464 : vector<8x128xf32>
    %c1_113 = arith.constant 1 : index
    %466 = arith.index_cast %253 : i32 to index
    %c0_114 = arith.constant 0 : index
    %467 = vector.load %arg2[%c1_113, %466, %c0_114] : memref<4x16x128xf32, #tpu.memory_space<vmem>>, vector<1x8x128xf32>
    %468 = vector.shape_cast %467 : vector<1x8x128xf32> to vector<8x128xf32>
    %469 = vector.shape_cast %465 : vector<8x128xf32> to vector<1x8x128xf32>
    tpu.vector_store %arg2[%c1_113, %466, %c0_114], %469 {strides = array<i32>} : memref<4x16x128xf32, #tpu.memory_space<vmem>>, vector<1x8x128xf32>,
    %cst_115 = arith.constant -0.00485011563 : f32
    %470 = vector.broadcast %cst_115 : f32 to vector<8x128xf32>
    %471 = arith.mulf %424, %470 : vector<8x128xf32>
    %cst_116 = arith.constant 0.00485011563 : f32
    %472 = vector.broadcast %cst_116 : f32 to vector<8x128xf32>
    %473 = arith.mulf %431, %472 : vector<8x128xf32>
    %474 = arith.addf %471, %473 : vector<8x128xf32>
    %cst_117 = arith.constant -5.34002425E-7 : f32
    %475 = vector.broadcast %cst_117 : f32 to vector<8x128xf32>
    %476 = arith.mulf %435, %475 : vector<8x128xf32>
    %477 = arith.addf %474, %476 : vector<8x128xf32>
    %cst_118 = arith.constant 0.0832890644 : f32
    %478 = vector.broadcast %cst_118 : f32 to vector<8x128xf32>
    %479 = arith.mulf %277, %478 : vector<8x128xf32>
    %480 = arith.addf %477, %479 : vector<8x128xf32>
    %cst_119 = arith.constant 1.000000e+00 : f32
    %481 = vector.broadcast %cst_119 : f32 to vector<8x128xf32>
    %482 = arith.subf %480, %481 : vector<8x128xf32>
    %c2_120 = arith.constant 2 : index
    %483 = arith.index_cast %253 : i32 to index
    %c0_121 = arith.constant 0 : index
    %484 = vector.load %arg2[%c2_120, %483, %c0_121] : memref<4x16x128xf32, #tpu.memory_space<vmem>>, vector<1x8x128xf32>
    %485 = vector.shape_cast %484 : vector<1x8x128xf32> to vector<8x128xf32>
    %486 = vector.shape_cast %482 : vector<8x128xf32> to vector<1x8x128xf32>
    tpu.vector_store %arg2[%c2_120, %483, %c0_121], %486 {strides = array<i32>} : memref<4x16x128xf32, #tpu.memory_space<vmem>>, vector<1x8x128xf32>,
    %cst_122 = arith.constant -0.00485011563 : f32
    %487 = vector.broadcast %cst_122 : f32 to vector<8x128xf32>
    %488 = arith.mulf %424, %487 : vector<8x128xf32>
    %cst_123 = arith.constant -0.00485011563 : f32
    %489 = vector.broadcast %cst_123 : f32 to vector<8x128xf32>
    %490 = arith.mulf %431, %489 : vector<8x128xf32>
    %491 = arith.addf %488, %490 : vector<8x128xf32>
    %cst_124 = arith.constant 5.34002425E-7 : f32
    %492 = vector.broadcast %cst_124 : f32 to vector<8x128xf32>
    %493 = arith.mulf %435, %492 : vector<8x128xf32>
    %494 = arith.addf %491, %493 : vector<8x128xf32>
    %cst_125 = arith.constant 0.0832890644 : f32
    %495 = vector.broadcast %cst_125 : f32 to vector<8x128xf32>
    %496 = arith.mulf %277, %495 : vector<8x128xf32>
    %497 = arith.addf %494, %496 : vector<8x128xf32>
    %cst_126 = arith.constant 1.000000e+00 : f32
    %498 = vector.broadcast %cst_126 : f32 to vector<8x128xf32>
    %499 = arith.subf %497, %498 : vector<8x128xf32>
    %c3_127 = arith.constant 3 : index
    %500 = arith.index_cast %253 : i32 to index
    %c0_128 = arith.constant 0 : index
    %501 = vector.load %arg2[%c3_127, %500, %c0_128] : memref<4x16x128xf32, #tpu.memory_space<vmem>>, vector<1x8x128xf32>
    %502 = vector.shape_cast %501 : vector<1x8x128xf32> to vector<8x128xf32>
    %503 = vector.shape_cast %499 : vector<8x128xf32> to vector<1x8x128xf32>
    tpu.vector_store %arg2[%c3_127, %500, %c0_128], %503 {strides = array<i32>} : memref<4x16x128xf32, #tpu.memory_space<vmem>>, vector<1x8x128xf32>,
    %c2_i32 = arith.constant 2 : i32
    return
  }
  func.func @transform_0(%arg0: i32) -> (i32, i32, i32) {
    %c0_i32 = arith.constant 0 : i32
    %c0_i32_0 = arith.constant 0 : i32
    %c0_i32_1 = arith.constant 0 : i32
    return %c0_i32, %arg0, %c0_i32_0 : i32, i32, i32
  }
  func.func @transform_1(%arg0: i32) -> (i32, i32, i32) {
    %c0_i32 = arith.constant 0 : i32
    %c0_i32_0 = arith.constant 0 : i32
    %c0_i32_1 = arith.constant 0 : i32
    return %c0_i32, %arg0, %c0_i32_0 : i32, i32, i32
  }
}

</mosaic_0001>

<llo_original>
// kernel: tpu_custom_call.1
$region0: #{tpu_custom_call.1}
  #allocation0 [shape = 'u32[]', space=smem, size = 0x4, offset = 0x4, fixed_abs, tag = 'smem constant byte address 0x4 - core index']
  #allocation1 [shape = 'u32[144,128]{1,0:T(1,128)}', space=vmem, size = 0x12000, scoped, tag = 'internal scratch']
  %s0 = inlined_call_operand.hbm [shape: f32[11,16,128], index: 0, kind: input, shape index: {}]
  %s1 = inlined_call_operand.hbm [shape: f32[4,16,128], index: 1, kind: output, shape index: {}]
  %s2 = sld [smem:[#allocation0]]
  $region18: #{tpu_custom_call.1} parent=0
    _
  %s4 = ssub.s32 1, %s2
  %s5 = scalar_select 0, %s4, %s2
  $region1: #{tpu_custom_call.1} parent=0
    #allocation2 [shape = 'u8[90112]{0}', space=vmem, size = 0x16000, scoped, tag = 'input window, operand 0, single buffered']
    #allocation3 [shape = 's32[1]{0}', space=sflag, size = 0x4, scoped, tag = 'scoped memory for tpu_custom_call.1']
    #allocation4 [shape = 's32[1]{0}', space=sflag, size = 0x4, scoped, tag = 'scoped memory for tpu_custom_call.1']
    #allocation5 [shape = 'u8[32768]{0}', space=vmem, size = 0x8000, scoped, tag = 'output window, operand 0, single buffered']
    %6 = vsyncpa [#allocation3], 0
    %7 = vsyncpa [#allocation4], 0
    // Predicated region
    $region2: #{tpu_custom_call.1} parent=1 // pred_check
      _
    $region3: #{tpu_custom_call.1} parent=1 // pred_check_branch
      %9 = sbr.rel (0) target = $region5
    $region4: #{tpu_custom_call.1} parent=1 // pred_region
      %s11 = ssub.s32 2816, 2816
      %12 = vsyncadd [#allocation3], %s11
      %s13 = sshll.u32 [#allocation2], 4
      %s14 = int_to_ptr.vmem [resolvable:$true] %s13
      %19 = dma.hbm_to_vmem [thread:$0]  %s0, 2816, %s14, [#allocation3], 128, 128, 8
    $region5: #{tpu_custom_call.1} parent=1 // pred_fallthru
      _
    // Predicated region
    $region6: #{tpu_custom_call.1} parent=1 // pred_check
      _
    $region7: #{tpu_custom_call.1} parent=1 // pred_check_branch
      %21 = sbr.rel (0) target = $region9
    $region8: #{tpu_custom_call.1} parent=1 // pred_region
      %22 = dma.done [#allocation3], 2816
    $region9: #{tpu_custom_call.1} parent=1 // pred_fallthru
      _
    %v23 = vld [vmem:[#allocation2] sm:$0xff]
    %s24 = sadd.s32 0, 16
    %s25 = scalar_lea.vmem [#allocation2], %s24
    %v26 = vld [vmem:[%s25] sm:$0xff]
    %s27 = sadd.s32 0, 32
    %s28 = scalar_lea.vmem [#allocation2], %s27
    %v29 = vld [vmem:[%s28] sm:$0xff]
    %s30 = sadd.s32 0, 48
    %s31 = scalar_lea.vmem [#allocation2], %s30
    %v32 = vld [vmem:[%s31] sm:$0xff]
    %s33 = sadd.s32 0, 64
    %s34 = scalar_lea.vmem [#allocation2], %s33
    %v35 = vld [vmem:[%s34] sm:$0xff]
    %s36 = sadd.s32 0, 80
    %s37 = scalar_lea.vmem [#allocation2], %s36
    %v38 = vld [vmem:[%s37] sm:$0xff]
    %s39 = sadd.s32 0, 96
    %s40 = scalar_lea.vmem [#allocation2], %s39
    %v41 = vld [vmem:[%s40] sm:$0xff]
    %s42 = sadd.s32 0, 112
    %s43 = scalar_lea.vmem [#allocation2], %s42
    %v44 = vld [vmem:[%s43] sm:$0xff]
    %s45 = sadd.s32 0, 128
    %s46 = scalar_lea.vmem [#allocation2], %s45
    %v47 = vld [vmem:[%s46] sm:$0xff]
    %s48 = sadd.s32 0, 144
    %s49 = scalar_lea.vmem [#allocation2], %s48
    %v50 = vld [vmem:[%s49] sm:$0xff]
    %s51 = sadd.s32 0, 160
    %s52 = scalar_lea.vmem [#allocation2], %s51
    %v53 = vld [vmem:[%s52] sm:$0xff]
    %v54 = vmul.f32 %v23, %v23
    %v55 = vmul.f32 %v26, %v26
    %v56 = vadd.f32 %v54, %v55
    %v57 = vmul.f32 %v29, %v29
    %v58 = vadd.f32 %v56, %v57
    %v59 = vmul.f32 %v32, %v32
    %v60 = vadd.f32 %v58, %v59
    %v61 = vrcp.pop %v60
    %v62 = vmul.f32 %v61, 2.0
    %v63 = vadd.f32 %v57, %v59
    %v64 = vmul.f32 %v62, %v63
    %v65 = vsub.f32 1.0, %v64
    %v66 = vmul.f32 %v26, %v29
    %v67 = vmul.f32 %v32, %v23
    %v68 = vsub.f32 %v66, %v67
    %v69 = vmul.f32 %v62, %v68
    %v70 = vmul.f32 %v26, %v32
    %v71 = vmul.f32 %v29, %v23
    %v72 = vadd.f32 %v70, %v71
    %v73 = vmul.f32 %v62, %v72
    %v74 = vadd.f32 %v66, %v67
    %v75 = vmul.f32 %v62, %v74
    %v76 = vadd.f32 %v55, %v59
    %v77 = vmul.f32 %v62, %v76
    %v78 = vsub.f32 1.0, %v77
    %v79 = vmul.f32 %v29, %v32
    %v80 = vmul.f32 %v26, %v23
    %v81 = vsub.f32 %v79, %v80
    %v82 = vmul.f32 %v62, %v81
    %v83 = vsub.f32 %v70, %v71
    %v84 = vmul.f32 %v62, %v83
    %v85 = vadd.f32 %v79, %v80
    %v86 = vmul.f32 %v62, %v85
    %v87 = vadd.f32 %v55, %v57
    %v88 = vmul.f32 %v62, %v87
    %v89 = vsub.f32 1.0, %v88
    %v90 = vmul.f32 %v65, %v65
    %v91 = vmul.f32 %v75, %v75
    %v92 = vadd.f32 %v90, %v91
    %vm93 = vcmp.gt.f32.partialorder %v92, 1e-12
    %v94 = vsel %vm93, %v92, 1.0
    %v95 = vrsqrt.pop %v94
    %v96 = vmul.f32 %v65, %v95
    %v97 = vsel %vm93, %v96, 1.0
    %v98 = vmul.f32 %v75, %v95
    %v99 = vsel %vm93, %v98, 0.0
    %v100 = vand.u32 2147483647, %v50
    %vm101 = vcmp.le.f32.partialorder %v100, 0.7853982
    %vm102 = vcmp.lt.s32.totalorder %v50, 0
    %v103 = vand.u32 %v50, 2139095040
    %v104 = vshrl.u32 %v103, 23
    %v105 = vsub.s32 %v104, 127
    %v106 = vand.u32 2147483647, %v50
    %v107 = vand.u32 %v106, 8388607
    %v108 = vor.u32 %v107, 8388608
    %v109 = vsub.s32 0, %v108
    %v110 = vadd.s32 %v105, 1
    %vm111 = vcmp.gt.s32.totalorder %v110, 0
    %v112 = vsel %vm111, %v110, 0
    %v113 = vshrl.u32 %v112, 5
    %v114 = vand.u32 %v112, 31
    %v115 = vsub.s32 32, %v114
    %v116 = vshrl.u32 683565275, %v115
    %v117 = vshll.u32 683565275, %v114
    %v118 = vshrl.u32 2475754826, %v115
    %v119 = vor.u32 %v117, %v118
    %v120 = vshll.u32 2475754826, %v114
    %v121 = vshrl.u32 2131351028, %v115
    %v122 = vor.u32 %v120, %v121
    %v123 = vshll.u32 2131351028, %v114
    %v124 = vshrl.u32 2102212464, %v115
    %v125 = vor.u32 %v123, %v124
    %v126 = vshll.u32 2102212464, %v114
    %v127 = vshrl.u32 920167782, %v115
    %v128 = vor.u32 %v126, %v127
    %v129 = vshll.u32 920167782, %v114
    %v130 = vshrl.u32 1326507024, %v115
    %v131 = vor.u32 %v129, %v130
    %vm132 = vcmp.lt.s32.totalorder %v113, 1
    %vm133 = vcmp.lt.s32.totalorder %v113, 2
    %vm134 = vcmp.lt.s32.totalorder %v113, 3
    %vm135 = vcmp.lt.s32.totalorder %v113, 4
    %v136 = vsel %vm132, %v116, %v119
    %v137 = vsel %vm135, %v125, 2102212464
    %v138 = vsel %vm134, %v122, %v137
    %v139 = vsel %vm133, %v136, %v138
    %v140 = vsel %vm132, %v119, %v122
    %v141 = vsel %vm135, %v128, 920167782
    %v142 = vsel %vm134, %v125, %v141
    %v143 = vsel %vm133, %v140, %v142
    %v144 = vsel %vm132, %v122, %v125
    %v145 = vsel %vm135, %v131, 1326507024
    %v146 = vsel %vm134, %v128, %v145
    %v147 = vsel %vm133, %v144, %v146
    %v148 = vshll.u32 %v108, 8
    %v149 = vmul.u32.u64.compose %v148, %v147
    %v150 = vextract.low.u32 %v149
    %v151 = vextract.high.u32 %v149
    %v152 = vmul.u32.u64.compose %v148, %v143
    %v153 = vextract.low.u32 %v152
    %v154 = vextract.high.u32 %v152
    %v155 = vmul.u32 %v148, %v139
    %v156 = vadd.s32 %v151, %v153
    %vm157 = vc.u32 %v151, %v153
    %v158 = vadd.s32 %v154, 1
    %v159 = vsel %vm157, %v158, %v154
    %v160 = vadd.s32 %v155, %v159
    %v161 = vadd.s32 %v160, 536870912
    %v162 = vshrl.u32 %v161, 30
    %v163 = vshll.u32 %v162, 30
    %v164 = vsub.s32 %v160, %v163
    %vm165 = vcmp.lt.s32.totalorder %v164, 0
    %v166 = vsub.s32 0, %v164
    %v167 = vsel %vm165, %v166, %v164
    %v168 = vclz %v167
    %v169 = vsub.s32 %v168, 2
    %vm170 = vcmp.gt.s32.totalorder 0, %v169
    %v171 = vsel %vm170, 0, %v169
    %v172 = vsub.s32 32, %v171
    %v173 = vshll.u32 %v164, %v171
    %v174 = vshrl.u32 %v156, %v172
    %v175 = vor.u32 %v173, %v174
    %v176 = vsub.s32 4294967266, %v171
    %v177 = vadd.s32 %v176, 127
    %v178 = vshll.u32 %v177, 23
    %v179 = vor.u32 4788187, %v178
    %v180 = vand.u32 2147483647, %v179
    %v182 = vcvt.s32.f32 %v175
    %v183 = vmul.f32 %v182, %v180
    %v184 = vxor.u32 %v183, 2147483648
    %v185 = vsel %vm102, %v184, %v183
    %v186 = vsub.s32 4, %v162
    %v187 = vsel %vm102, %v186, %v162
    %v188 = vsel %vm101, %v50, %v185
    %v189 = vsel %vm101, 0, %v187
    %v190 = vcosq.f32.pop %v188
    %v191 = vsinq.f32.pop %v188
    %vm192 = vweird.f32 %v50
    %v193 = vand.u32 %v189, 3
    %vm194 = vcmp.lt.s32.totalorder %v193, 2
    %vm195 = vcmp.eq.s32.totalorder %v193, 0
    %v196 = vxor.u32 %v191, 2147483648
    %v197 = vsel %vm195, %v190, %v196
    %vm198 = vcmp.eq.s32.totalorder %v193, 2
    %v199 = vxor.u32 %v190, 2147483648
    %v200 = vsel %vm198, %v199, %v191
    %v201 = vsel %vm194, %v197, %v200
    %v202 = vsel %vm192, nan, %v201
    %v203 = vand.u32 2147483647, %v50
    %vm204 = vcmp.le.f32.partialorder %v203, 0.7853982
    %vm205 = vcmp.lt.s32.totalorder %v50, 0
    %v206 = vand.u32 %v50, 2139095040
    %v207 = vshrl.u32 %v206, 23
    %v208 = vsub.s32 %v207, 127
    %v209 = vand.u32 2147483647, %v50
    %v210 = vand.u32 %v209, 8388607
    %v211 = vor.u32 %v210, 8388608
    %v212 = vsub.s32 0, %v211
    %v213 = vadd.s32 %v208, 1
    %vm214 = vcmp.gt.s32.totalorder %v213, 0
    %v215 = vsel %vm214, %v213, 0
    %v216 = vshrl.u32 %v215, 5
    %v217 = vand.u32 %v215, 31
    %v218 = vsub.s32 32, %v217
    %v219 = vshrl.u32 683565275, %v218
    %v220 = vshll.u32 683565275, %v217
    %v221 = vshrl.u32 2475754826, %v218
    %v222 = vor.u32 %v220, %v221
    %v223 = vshll.u32 2475754826, %v217
    %v224 = vshrl.u32 2131351028, %v218
    %v225 = vor.u32 %v223, %v224
    %v226 = vshll.u32 2131351028, %v217
    %v227 = vshrl.u32 2102212464, %v218
    %v228 = vor.u32 %v226, %v227
    %v229 = vshll.u32 2102212464, %v217
    %v230 = vshrl.u32 920167782, %v218
    %v231 = vor.u32 %v229, %v230
    %v232 = vshll.u32 920167782, %v217
    %v233 = vshrl.u32 1326507024, %v218
    %v234 = vor.u32 %v232, %v233
    %vm235 = vcmp.lt.s32.totalorder %v216, 1
    %vm236 = vcmp.lt.s32.totalorder %v216, 2
    %vm237 = vcmp.lt.s32.totalorder %v216, 3
    %vm238 = vcmp.lt.s32.totalorder %v216, 4
    %v239 = vsel %vm235, %v219, %v222
    %v240 = vsel %vm238, %v228, 2102212464
    %v241 = vsel %vm237, %v225, %v240
    %v242 = vsel %vm236, %v239, %v241
    %v243 = vsel %vm235, %v222, %v225
    %v244 = vsel %vm238, %v231, 920167782
    %v245 = vsel %vm237, %v228, %v244
    %v246 = vsel %vm236, %v243, %v245
    %v247 = vsel %vm235, %v225, %v228
    %v248 = vsel %vm238, %v234, 1326507024
    %v249 = vsel %vm237, %v231, %v248
    %v250 = vsel %vm236, %v247, %v249
    %v251 = vshll.u32 %v211, 8
    %v252 = vmul.u32.u64.compose %v251, %v250
    %v253 = vextract.low.u32 %v252
    %v254 = vextract.high.u32 %v252
    %v255 = vmul.u32.u64.compose %v251, %v246
    %v256 = vextract.low.u32 %v255
    %v257 = vextract.high.u32 %v255
    %v258 = vmul.u32 %v251, %v242
    %v259 = vadd.s32 %v254, %v256
    %vm260 = vc.u32 %v254, %v256
    %v261 = vadd.s32 %v257, 1
    %v262 = vsel %vm260, %v261, %v257
    %v263 = vadd.s32 %v258, %v262
    %v264 = vadd.s32 %v263, 536870912
    %v265 = vshrl.u32 %v264, 30
    %v266 = vshll.u32 %v265, 30
    %v267 = vsub.s32 %v263, %v266
    %vm268 = vcmp.lt.s32.totalorder %v267, 0
    %v269 = vsub.s32 0, %v267
    %v270 = vsel %vm268, %v269, %v267
    %v271 = vclz %v270
    %v272 = vsub.s32 %v271, 2
    %vm273 = vcmp.gt.s32.totalorder 0, %v272
    %v274 = vsel %vm273, 0, %v272
    %v275 = vsub.s32 32, %v274
    %v276 = vshll.u32 %v267, %v274
    %v277 = vshrl.u32 %v259, %v275
    %v278 = vor.u32 %v276, %v277
    %v279 = vsub.s32 4294967266, %v274
    %v280 = vadd.s32 %v279, 127
    %v281 = vshll.u32 %v280, 23
    %v282 = vor.u32 4788187, %v281
    %v283 = vand.u32 2147483647, %v282
    %v285 = vcvt.s32.f32 %v278
    %v286 = vmul.f32 %v285, %v283
    %v287 = vxor.u32 %v286, 2147483648
    %v288 = vsel %vm205, %v287, %v286
    %v289 = vsub.s32 4, %v265
    %v290 = vsel %vm205, %v289, %v265
    %v291 = vsel %vm204, %v50, %v288
    %v292 = vsel %vm204, 0, %v290
    %v293 = vcosq.f32.pop %v291
    %v294 = vsinq.f32.pop %v291
    %vm295 = vweird.f32 %v50
    %v296 = vadd.s32 %v292, 3
    %v297 = vand.u32 %v296, 3
    %vm298 = vcmp.lt.s32.totalorder %v297, 2
    %vm299 = vcmp.eq.s32.totalorder %v297, 0
    %v300 = vxor.u32 %v294, 2147483648
    %v301 = vsel %vm299, %v293, %v300
    %vm302 = vcmp.eq.s32.totalorder %v297, 2
    %v303 = vxor.u32 %v293, 2147483648
    %v304 = vsel %vm302, %v303, %v294
    %v305 = vsel %vm298, %v301, %v304
    %v306 = vsel %vm295, nan, %v305
    %v307 = vand.u32 2147483647, %v53
    %vm308 = vcmp.le.f32.partialorder %v307, 0.7853982
    %vm309 = vcmp.lt.s32.totalorder %v53, 0
    %v310 = vand.u32 %v53, 2139095040
    %v311 = vshrl.u32 %v310, 23
    %v312 = vsub.s32 %v311, 127
    %v313 = vand.u32 2147483647, %v53
    %v314 = vand.u32 %v313, 8388607
    %v315 = vor.u32 %v314, 8388608
    %v316 = vsub.s32 0, %v315
    %v317 = vadd.s32 %v312, 1
    %vm318 = vcmp.gt.s32.totalorder %v317, 0
    %v319 = vsel %vm318, %v317, 0
    %v320 = vshrl.u32 %v319, 5
    %v321 = vand.u32 %v319, 31
    %v322 = vsub.s32 32, %v321
    %v323 = vshrl.u32 683565275, %v322
    %v324 = vshll.u32 683565275, %v321
    %v325 = vshrl.u32 2475754826, %v322
    %v326 = vor.u32 %v324, %v325
    %v327 = vshll.u32 2475754826, %v321
    %v328 = vshrl.u32 2131351028, %v322
    %v329 = vor.u32 %v327, %v328
    %v330 = vshll.u32 2131351028, %v321
    %v331 = vshrl.u32 2102212464, %v322
    %v332 = vor.u32 %v330, %v331
    %v333 = vshll.u32 2102212464, %v321
    %v334 = vshrl.u32 920167782, %v322
    %v335 = vor.u32 %v333, %v334
    %v336 = vshll.u32 920167782, %v321
    %v337 = vshrl.u32 1326507024, %v322
    %v338 = vor.u32 %v336, %v337
    %vm339 = vcmp.lt.s32.totalorder %v320, 1
    %vm340 = vcmp.lt.s32.totalorder %v320, 2
    %vm341 = vcmp.lt.s32.totalorder %v320, 3
    %vm342 = vcmp.lt.s32.totalorder %v320, 4
    %v343 = vsel %vm339, %v323, %v326
    %v344 = vsel %vm342, %v332, 2102212464
    %v345 = vsel %vm341, %v329, %v344
    %v346 = vsel %vm340, %v343, %v345
    %v347 = vsel %vm339, %v326, %v329
    %v348 = vsel %vm342, %v335, 920167782
    %v349 = vsel %vm341, %v332, %v348
    %v350 = vsel %vm340, %v347, %v349
    %v351 = vsel %vm339, %v329, %v332
    %v352 = vsel %vm342, %v338, 1326507024
    %v353 = vsel %vm341, %v335, %v352
    %v354 = vsel %vm340, %v351, %v353
    %v355 = vshll.u32 %v315, 8
    %v356 = vmul.u32.u64.compose %v355, %v354
    %v357 = vextract.low.u32 %v356
    %v358 = vextract.high.u32 %v356
    %v359 = vmul.u32.u64.compose %v355, %v350
    %v360 = vextract.low.u32 %v359
    %v361 = vextract.high.u32 %v359
    %v362 = vmul.u32 %v355, %v346
    %v363 = vadd.s32 %v358, %v360
    %vm364 = vc.u32 %v358, %v360
    %v365 = vadd.s32 %v361, 1
    %v366 = vsel %vm364, %v365, %v361
    %v367 = vadd.s32 %v362, %v366
    %v368 = vadd.s32 %v367, 536870912
    %v369 = vshrl.u32 %v368, 30
    %v370 = vshll.u32 %v369, 30
    %v371 = vsub.s32 %v367, %v370
    %vm372 = vcmp.lt.s32.totalorder %v371, 0
    %v373 = vsub.s32 0, %v371
    %v374 = vsel %vm372, %v373, %v371
    %v375 = vclz %v374
    %v376 = vsub.s32 %v375, 2
    %vm377 = vcmp.gt.s32.totalorder 0, %v376
    %v378 = vsel %vm377, 0, %v376
    %v379 = vsub.s32 32, %v378
    %v380 = vshll.u32 %v371, %v378
    %v381 = vshrl.u32 %v363, %v379
    %v382 = vor.u32 %v380, %v381
    %v383 = vsub.s32 4294967266, %v378
    %v384 = vadd.s32 %v383, 127
    %v385 = vshll.u32 %v384, 23
    %v386 = vor.u32 4788187, %v385
    %v387 = vand.u32 2147483647, %v386
    %v389 = vcvt.s32.f32 %v382
    %v390 = vmul.f32 %v389, %v387
    %v391 = vxor.u32 %v390, 2147483648
    %v392 = vsel %vm309, %v391, %v390
    %v393 = vsub.s32 4, %v369
    %v394 = vsel %vm309, %v393, %v369
    %v395 = vsel %vm308, %v53, %v392
    %v396 = vsel %vm308, 0, %v394
    %v397 = vcosq.f32.pop %v395
    %v398 = vsinq.f32.pop %v395
    %vm399 = vweird.f32 %v53
    %v400 = vand.u32 %v396, 3
    %vm401 = vcmp.lt.s32.totalorder %v400, 2
    %vm402 = vcmp.eq.s32.totalorder %v400, 0
    %v403 = vxor.u32 %v398, 2147483648
    %v404 = vsel %vm402, %v397, %v403
    %vm405 = vcmp.eq.s32.totalorder %v400, 2
    %v406 = vxor.u32 %v397, 2147483648
    %v407 = vsel %vm405, %v406, %v398
    %v408 = vsel %vm401, %v404, %v407
    %v409 = vsel %vm399, nan, %v408
    %v410 = vand.u32 2147483647, %v53
    %vm411 = vcmp.le.f32.partialorder %v410, 0.7853982
    %vm412 = vcmp.lt.s32.totalorder %v53, 0
    %v413 = vand.u32 %v53, 2139095040
    %v414 = vshrl.u32 %v413, 23
    %v415 = vsub.s32 %v414, 127
    %v416 = vand.u32 2147483647, %v53
    %v417 = vand.u32 %v416, 8388607
    %v418 = vor.u32 %v417, 8388608
    %v419 = vsub.s32 0, %v418
    %v420 = vadd.s32 %v415, 1
    %vm421 = vcmp.gt.s32.totalorder %v420, 0
    %v422 = vsel %vm421, %v420, 0
    %v423 = vshrl.u32 %v422, 5
    %v424 = vand.u32 %v422, 31
    %v425 = vsub.s32 32, %v424
    %v426 = vshrl.u32 683565275, %v425
    %v427 = vshll.u32 683565275, %v424
    %v428 = vshrl.u32 2475754826, %v425
    %v429 = vor.u32 %v427, %v428
    %v430 = vshll.u32 2475754826, %v424
    %v431 = vshrl.u32 2131351028, %v425
    %v432 = vor.u32 %v430, %v431
    %v433 = vshll.u32 2131351028, %v424
    %v434 = vshrl.u32 2102212464, %v425
    %v435 = vor.u32 %v433, %v434
    %v436 = vshll.u32 2102212464, %v424
    %v437 = vshrl.u32 920167782, %v425
    %v438 = vor.u32 %v436, %v437
    %v439 = vshll.u32 920167782, %v424
    %v440 = vshrl.u32 1326507024, %v425
    %v441 = vor.u32 %v439, %v440
    %vm442 = vcmp.lt.s32.totalorder %v423, 1
    %vm443 = vcmp.lt.s32.totalorder %v423, 2
    %vm444 = vcmp.lt.s32.totalorder %v423, 3
    %vm445 = vcmp.lt.s32.totalorder %v423, 4
    %v446 = vsel %vm442, %v426, %v429
    %v447 = vsel %vm445, %v435, 2102212464
    %v448 = vsel %vm444, %v432, %v447
    %v449 = vsel %vm443, %v446, %v448
    %v450 = vsel %vm442, %v429, %v432
    %v451 = vsel %vm445, %v438, 920167782
    %v452 = vsel %vm444, %v435, %v451
    %v453 = vsel %vm443, %v450, %v452
    %v454 = vsel %vm442, %v432, %v435
    %v455 = vsel %vm445, %v441, 1326507024
    %v456 = vsel %vm444, %v438, %v455
    %v457 = vsel %vm443, %v454, %v456
    %v458 = vshll.u32 %v418, 8
    %v459 = vmul.u32.u64.compose %v458, %v457
    %v460 = vextract.low.u32 %v459
    %v461 = vextract.high.u32 %v459
    %v462 = vmul.u32.u64.compose %v458, %v453
    %v463 = vextract.low.u32 %v462
    %v464 = vextract.high.u32 %v462
    %v465 = vmul.u32 %v458, %v449
    %v466 = vadd.s32 %v461, %v463
    %vm467 = vc.u32 %v461, %v463
    %v468 = vadd.s32 %v464, 1
    %v469 = vsel %vm467, %v468, %v464
    %v470 = vadd.s32 %v465, %v469
    %v471 = vadd.s32 %v470, 536870912
    %v472 = vshrl.u32 %v471, 30
    %v473 = vshll.u32 %v472, 30
    %v474 = vsub.s32 %v470, %v473
    %vm475 = vcmp.lt.s32.totalorder %v474, 0
    %v476 = vsub.s32 0, %v474
    %v477 = vsel %vm475, %v476, %v474
    %v478 = vclz %v477
    %v479 = vsub.s32 %v478, 2
    %vm480 = vcmp.gt.s32.totalorder 0, %v479
    %v481 = vsel %vm480, 0, %v479
    %v482 = vsub.s32 32, %v481
    %v483 = vshll.u32 %v474, %v481
    %v484 = vshrl.u32 %v466, %v482
    %v485 = vor.u32 %v483, %v484
    %v486 = vsub.s32 4294967266, %v481
    %v487 = vadd.s32 %v486, 127
    %v488 = vshll.u32 %v487, 23
    %v489 = vor.u32 4788187, %v488
    %v490 = vand.u32 2147483647, %v489
    %v492 = vcvt.s32.f32 %v485
    %v493 = vmul.f32 %v492, %v490
    %v494 = vxor.u32 %v493, 2147483648
    %v495 = vsel %vm412, %v494, %v493
    %v496 = vsub.s32 4, %v472
    %v497 = vsel %vm412, %v496, %v472
    %v498 = vsel %vm411, %v53, %v495
    %v499 = vsel %vm411, 0, %v497
    %v500 = vcosq.f32.pop %v498
    %v501 = vsinq.f32.pop %v498
    %vm502 = vweird.f32 %v53
    %v503 = vadd.s32 %v499, 3
    %v504 = vand.u32 %v503, 3
    %vm505 = vcmp.lt.s32.totalorder %v504, 2
    %vm506 = vcmp.eq.s32.totalorder %v504, 0
    %v507 = vxor.u32 %v501, 2147483648
    %v508 = vsel %vm506, %v500, %v507
    %vm509 = vcmp.eq.s32.totalorder %v504, 2
    %v510 = vxor.u32 %v500, 2147483648
    %v511 = vsel %vm509, %v510, %v501
    %v512 = vsel %vm505, %v508, %v511
    %v513 = vsel %vm502, nan, %v512
    %v514 = vmul.f32 %v97, %v409
    %v515 = vmul.f32 %v99, %v306
    %v516 = vmul.f32 %v515, %v513
    %v517 = vsub.f32 %v514, %v516
    %v518 = vsub.f32 0.0, %v99
    %v519 = vmul.f32 %v518, %v202
    %v520 = vmul.f32 %v97, %v513
    %v521 = vmul.f32 %v515, %v409
    %v522 = vadd.f32 %v520, %v521
    %v523 = vmul.f32 %v99, %v409
    %v524 = vmul.f32 %v97, %v306
    %v525 = vmul.f32 %v524, %v513
    %v526 = vadd.f32 %v523, %v525
    %v527 = vmul.f32 %v97, %v202
    %v528 = vmul.f32 %v99, %v513
    %v529 = vmul.f32 %v524, %v409
    %v530 = vsub.f32 %v528, %v529
    %v531 = vsub.f32 0.0, %v202
    %v532 = vmul.f32 %v531, %v513
    %v533 = vmul.f32 %v202, %v409
    %v534 = vmul.f32 %v517, %v73
    %v535 = vmul.f32 %v526, %v82
    %v536 = vadd.f32 %v534, %v535
    %v537 = vmul.f32 %v532, %v89
    %v538 = vadd.f32 %v536, %v537
    %v539 = vmul.f32 %v519, %v73
    %v540 = vmul.f32 %v527, %v82
    %v541 = vadd.f32 %v539, %v540
    %v542 = vmul.f32 %v306, %v89
    %v543 = vadd.f32 %v541, %v542
    %v544 = vmul.f32 %v522, %v73
    %v545 = vmul.f32 %v530, %v82
    %v546 = vadd.f32 %v544, %v545
    %v547 = vmul.f32 %v533, %v89
    %v548 = vadd.f32 %v546, %v547
    %v549 = vmul.f32 %v522, %v65
    %v550 = vmul.f32 %v530, %v75
    %v551 = vadd.f32 %v549, %v550
    %v552 = vmul.f32 %v533, %v84
    %v553 = vadd.f32 %v551, %v552
    %v554 = vmul.f32 %v522, %v69
    %v555 = vmul.f32 %v530, %v78
    %v556 = vadd.f32 %v554, %v555
    %v557 = vmul.f32 %v533, %v86
    %v558 = vadd.f32 %v556, %v557
    %v559 = vsub.f32 %v558, %v543
    %v560 = vmul.f32 %v559, 0.5
    %v561 = vsub.f32 %v538, %v553
    %v562 = vmul.f32 %v561, 0.5
    %v563 = vmul.f32 %v538, %v47
    %v564 = vsub.f32 %v35, %v563
    %v565 = vmul.f32 %v543, %v47
    %v566 = vsub.f32 %v38, %v565
    %v567 = vmul.f32 %v548, %v47
    %v568 = vsub.f32 %v41, %v567
    %v569 = vsub.f32 0.0, %v560
    %v570 = vmul.f32 %v569, 428.57144
    %v571 = vmul.f32 %v564, 74.28571
    %v572 = vsub.f32 %v570, %v571
    %v573 = vsub.f32 0.0, %v562
    %v574 = vmul.f32 %v573, 428.57144
    %v575 = vmul.f32 %v566, 74.28571
    %v576 = vsub.f32 %v574, %v575
    %v577 = vsub.f32 0.0, %v568
    %v578 = vmul.f32 %v577, 2.0833333
    %v579 = vmul.f32 %v572, 0.0048501156
    %v580 = vmul.f32 %v576, -0.0048501156
    %v581 = vadd.f32 %v579, %v580
    %v582 = vmul.f32 %v578, -5.340024e-07
    %v583 = vadd.f32 %v581, %v582
    %v584 = vmul.f32 %v44, 0.083289064
    %v585 = vadd.f32 %v583, %v584
    %v586 = vsub.f32 %v585, 1.0
    %587 = vst [vmem:[#allocation5] sm:$0xff] %v586
    %v588 = vmul.f32 %v576, 0.0048501156
    %v589 = vadd.f32 %v579, %v588
    %v590 = vmul.f32 %v578, 5.340024e-07
    %v591 = vadd.f32 %v589, %v590
    %v592 = vadd.f32 %v591, %v584
    %v593 = vsub.f32 %v592, 1.0
    %s594 = scalar_lea.vmem [#allocation5], %s24
    %595 = vst [vmem:[%s594] sm:$0xff] %v593
    %v596 = vmul.f32 %v572, -0.0048501156
    %v597 = vadd.f32 %v596, %v588
    %v598 = vadd.f32 %v597, %v582
    %v599 = vadd.f32 %v598, %v584
    %v600 = vsub.f32 %v599, 1.0
    %s601 = scalar_lea.vmem [#allocation5], %s27
    %602 = vst [vmem:[%s601] sm:$0xff] %v600
    %v603 = vadd.f32 %v596, %v580
    %v604 = vadd.f32 %v603, %v590
    %v605 = vadd.f32 %v604, %v584
    %v606 = vsub.f32 %v605, 1.0
    %s607 = scalar_lea.vmem [#allocation5], %s30
    %608 = vst [vmem:[%s607] sm:$0xff] %v606
    %s609 = scalar_lea.vmem [#allocation2], 8
    %v610 = vld [vmem:[%s609] sm:$0xff]
    %s611 = sadd.s32 8, 16
    %s612 = scalar_lea.vmem [#allocation2], %s611
    %v613 = vld [vmem:[%s612] sm:$0xff]
    %s614 = sadd.s32 8, 32
    %s615 = scalar_lea.vmem [#allocation2], %s614
    %v616 = vld [vmem:[%s615] sm:$0xff]
    %s617 = sadd.s32 8, 48
    %s618 = scalar_lea.vmem [#allocation2], %s617
    %v619 = vld [vmem:[%s618] sm:$0xff]
    %s620 = sadd.s32 8, 64
    %s621 = scalar_lea.vmem [#allocation2], %s620
    %v622 = vld [vmem:[%s621] sm:$0xff]
    %s623 = sadd.s32 8, 80
    %s624 = scalar_lea.vmem [#allocation2], %s623
    %v625 = vld [vmem:[%s624] sm:$0xff]
    %s626 = sadd.s32 8, 96
    %s627 = scalar_lea.vmem [#allocation2], %s626
    %v628 = vld [vmem:[%s627] sm:$0xff]
    %s629 = sadd.s32 8, 112
    %s630 = scalar_lea.vmem [#allocation2], %s629
    %v631 = vld [vmem:[%s630] sm:$0xff]
    %s632 = sadd.s32 8, 128
    %s633 = scalar_lea.vmem [#allocation2], %s632
    %v634 = vld [vmem:[%s633] sm:$0xff]
    %s635 = sadd.s32 8, 144
    %s636 = scalar_lea.vmem [#allocation2], %s635
    %v637 = vld [vmem:[%s636] sm:$0xff]
    %s638 = sadd.s32 8, 160
    %s639 = scalar_lea.vmem [#allocation2], %s638
    %v640 = vld [vmem:[%s639] sm:$0xff]
    %v641 = vmul.f32 %v610, %v610
    %v642 = vmul.f32 %v613, %v613
    %v643 = vadd.f32 %v641, %v642
    %v644 = vmul.f32 %v616, %v616
    %v645 = vadd.f32 %v643, %v644
    %v646 = vmul.f32 %v619, %v619
    %v647 = vadd.f32 %v645, %v646
    %v648 = vrcp.pop %v647
    %v649 = vmul.f32 %v648, 2.0
    %v650 = vadd.f32 %v644, %v646
    %v651 = vmul.f32 %v649, %v650
    %v652 = vsub.f32 1.0, %v651
    %v653 = vmul.f32 %v613, %v616
    %v654 = vmul.f32 %v619, %v610
    %v655 = vsub.f32 %v653, %v654
    %v656 = vmul.f32 %v649, %v655
    %v657 = vmul.f32 %v613, %v619
    %v658 = vmul.f32 %v616, %v610
    %v659 = vadd.f32 %v657, %v658
    %v660 = vmul.f32 %v649, %v659
    %v661 = vadd.f32 %v653, %v654
    %v662 = vmul.f32 %v649, %v661
    %v663 = vadd.f32 %v642, %v646
    %v664 = vmul.f32 %v649, %v663
    %v665 = vsub.f32 1.0, %v664
    %v666 = vmul.f32 %v616, %v619
    %v667 = vmul.f32 %v613, %v610
    %v668 = vsub.f32 %v666, %v667
    %v669 = vmul.f32 %v649, %v668
    %v670 = vsub.f32 %v657, %v658
    %v671 = vmul.f32 %v649, %v670
    %v672 = vadd.f32 %v666, %v667
    %v673 = vmul.f32 %v649, %v672
    %v674 = vadd.f32 %v642, %v644
    %v675 = vmul.f32 %v649, %v674
    %v676 = vsub.f32 1.0, %v675
    %v677 = vmul.f32 %v652, %v652
    %v678 = vmul.f32 %v662, %v662
    %v679 = vadd.f32 %v677, %v678
    %vm680 = vcmp.gt.f32.partialorder %v679, 1e-12
    %v681 = vsel %vm680, %v679, 1.0
    %v682 = vrsqrt.pop %v681
    %v683 = vmul.f32 %v652, %v682
    %v684 = vsel %vm680, %v683, 1.0
    %v685 = vmul.f32 %v662, %v682
    %v686 = vsel %vm680, %v685, 0.0
    %v687 = vand.u32 2147483647, %v637
    %vm688 = vcmp.le.f32.partialorder %v687, 0.7853982
    %vm689 = vcmp.lt.s32.totalorder %v637, 0
    %v690 = vand.u32 %v637, 2139095040
    %v691 = vshrl.u32 %v690, 23
    %v692 = vsub.s32 %v691, 127
    %v693 = vand.u32 2147483647, %v637
    %v694 = vand.u32 %v693, 8388607
    %v695 = vor.u32 %v694, 8388608
    %v696 = vsub.s32 0, %v695
    %v697 = vadd.s32 %v692, 1
    %vm698 = vcmp.gt.s32.totalorder %v697, 0
    %v699 = vsel %vm698, %v697, 0
    %v700 = vshrl.u32 %v699, 5
    %v701 = vand.u32 %v699, 31
    %v702 = vsub.s32 32, %v701
    %v703 = vshrl.u32 683565275, %v702
    %v704 = vshll.u32 683565275, %v701
    %v705 = vshrl.u32 2475754826, %v702
    %v706 = vor.u32 %v704, %v705
    %v707 = vshll.u32 2475754826, %v701
    %v708 = vshrl.u32 2131351028, %v702
    %v709 = vor.u32 %v707, %v708
    %v710 = vshll.u32 2131351028, %v701
    %v711 = vshrl.u32 2102212464, %v702
    %v712 = vor.u32 %v710, %v711
    %v713 = vshll.u32 2102212464, %v701
    %v714 = vshrl.u32 920167782, %v702
    %v715 = vor.u32 %v713, %v714
    %v716 = vshll.u32 920167782, %v701
    %v717 = vshrl.u32 1326507024, %v702
    %v718 = vor.u32 %v716, %v717
    %vm719 = vcmp.lt.s32.totalorder %v700, 1
    %vm720 = vcmp.lt.s32.totalorder %v700, 2
    %vm721 = vcmp.lt.s32.totalorder %v700, 3
    %vm722 = vcmp.lt.s32.totalorder %v700, 4
    %v723 = vsel %vm719, %v703, %v706
    %v724 = vsel %vm722, %v712, 2102212464
    %v725 = vsel %vm721, %v709, %v724
    %v726 = vsel %vm720, %v723, %v725
    %v727 = vsel %vm719, %v706, %v709
    %v728 = vsel %vm722, %v715, 920167782
    %v729 = vsel %vm721, %v712, %v728
    %v730 = vsel %vm720, %v727, %v729
    %v731 = vsel %vm719, %v709, %v712
    %v732 = vsel %vm722, %v718, 1326507024
    %v733 = vsel %vm721, %v715, %v732
    %v734 = vsel %vm720, %v731, %v733
    %v735 = vshll.u32 %v695, 8
    %v736 = vmul.u32.u64.compose %v735, %v734
    %v737 = vextract.low.u32 %v736
    %v738 = vextract.high.u32 %v736
    %v739 = vmul.u32.u64.compose %v735, %v730
    %v740 = vextract.low.u32 %v739
    %v741 = vextract.high.u32 %v739
    %v742 = vmul.u32 %v735, %v726
    %v743 = vadd.s32 %v738, %v740
    %vm744 = vc.u32 %v738, %v740
    %v745 = vadd.s32 %v741, 1
    %v746 = vsel %vm744, %v745, %v741
    %v747 = vadd.s32 %v742, %v746
    %v748 = vadd.s32 %v747, 536870912
    %v749 = vshrl.u32 %v748, 30
    %v750 = vshll.u32 %v749, 30
    %v751 = vsub.s32 %v747, %v750
    %vm752 = vcmp.lt.s32.totalorder %v751, 0
    %v753 = vsub.s32 0, %v751
    %v754 = vsel %vm752, %v753, %v751
    %v755 = vclz %v754
    %v756 = vsub.s32 %v755, 2
    %vm757 = vcmp.gt.s32.totalorder 0, %v756
    %v758 = vsel %vm757, 0, %v756
    %v759 = vsub.s32 32, %v758
    %v760 = vshll.u32 %v751, %v758
    %v761 = vshrl.u32 %v743, %v759
    %v762 = vor.u32 %v760, %v761
    %v763 = vsub.s32 4294967266, %v758
    %v764 = vadd.s32 %v763, 127
    %v765 = vshll.u32 %v764, 23
    %v766 = vor.u32 4788187, %v765
    %v767 = vand.u32 2147483647, %v766
    %v769 = vcvt.s32.f32 %v762
    %v770 = vmul.f32 %v769, %v767
    %v771 = vxor.u32 %v770, 2147483648
    %v772 = vsel %vm689, %v771, %v770
    %v773 = vsub.s32 4, %v749
    %v774 = vsel %vm689, %v773, %v749
    %v775 = vsel %vm688, %v637, %v772
    %v776 = vsel %vm688, 0, %v774
    %v777 = vcosq.f32.pop %v775
    %v778 = vsinq.f32.pop %v775
    %vm779 = vweird.f32 %v637
    %v780 = vand.u32 %v776, 3
    %vm781 = vcmp.lt.s32.totalorder %v780, 2
    %vm782 = vcmp.eq.s32.totalorder %v780, 0
    %v783 = vxor.u32 %v778, 2147483648
    %v784 = vsel %vm782, %v777, %v783
    %vm785 = vcmp.eq.s32.totalorder %v780, 2
    %v786 = vxor.u32 %v777, 2147483648
    %v787 = vsel %vm785, %v786, %v778
    %v788 = vsel %vm781, %v784, %v787
    %v789 = vsel %vm779, nan, %v788
    %v790 = vand.u32 2147483647, %v637
    %vm791 = vcmp.le.f32.partialorder %v790, 0.7853982
    %vm792 = vcmp.lt.s32.totalorder %v637, 0
    %v793 = vand.u32 %v637, 2139095040
    %v794 = vshrl.u32 %v793, 23
    %v795 = vsub.s32 %v794, 127
    %v796 = vand.u32 2147483647, %v637
    %v797 = vand.u32 %v796, 8388607
    %v798 = vor.u32 %v797, 8388608
    %v799 = vsub.s32 0, %v798
    %v800 = vadd.s32 %v795, 1
    %vm801 = vcmp.gt.s32.totalorder %v800, 0
    %v802 = vsel %vm801, %v800, 0
    %v803 = vshrl.u32 %v802, 5
    %v804 = vand.u32 %v802, 31
    %v805 = vsub.s32 32, %v804
    %v806 = vshrl.u32 683565275, %v805
    %v807 = vshll.u32 683565275, %v804
    %v808 = vshrl.u32 2475754826, %v805
    %v809 = vor.u32 %v807, %v808
    %v810 = vshll.u32 2475754826, %v804
    %v811 = vshrl.u32 2131351028, %v805
    %v812 = vor.u32 %v810, %v811
    %v813 = vshll.u32 2131351028, %v804
    %v814 = vshrl.u32 2102212464, %v805
    %v815 = vor.u32 %v813, %v814
    %v816 = vshll.u32 2102212464, %v804
    %v817 = vshrl.u32 920167782, %v805
    %v818 = vor.u32 %v816, %v817
    %v819 = vshll.u32 920167782, %v804
    %v820 = vshrl.u32 1326507024, %v805
    %v821 = vor.u32 %v819, %v820
    %vm822 = vcmp.lt.s32.totalorder %v803, 1
    %vm823 = vcmp.lt.s32.totalorder %v803, 2
    %vm824 = vcmp.lt.s32.totalorder %v803, 3
    %vm825 = vcmp.lt.s32.totalorder %v803, 4
    %v826 = vsel %vm822, %v806, %v809
    %v827 = vsel %vm825, %v815, 2102212464
    %v828 = vsel %vm824, %v812, %v827
    %v829 = vsel %vm823, %v826, %v828
    %v830 = vsel %vm822, %v809, %v812
    %v831 = vsel %vm825, %v818, 920167782
    %v832 = vsel %vm824, %v815, %v831
    %v833 = vsel %vm823, %v830, %v832
    %v834 = vsel %vm822, %v812, %v815
    %v835 = vsel %vm825, %v821, 1326507024
    %v836 = vsel %vm824, %v818, %v835
    %v837 = vsel %vm823, %v834, %v836
    %v838 = vshll.u32 %v798, 8
    %v839 = vmul.u32.u64.compose %v838, %v837
    %v840 = vextract.low.u32 %v839
    %v841 = vextract.high.u32 %v839
    %v842 = vmul.u32.u64.compose %v838, %v833
    %v843 = vextract.low.u32 %v842
    %v844 = vextract.high.u32 %v842
    %v845 = vmul.u32 %v838, %v829
    %v846 = vadd.s32 %v841, %v843
    %vm847 = vc.u32 %v841, %v843
    %v848 = vadd.s32 %v844, 1
    %v849 = vsel %vm847, %v848, %v844
    %v850 = vadd.s32 %v845, %v849
    %v851 = vadd.s32 %v850, 536870912
    %v852 = vshrl.u32 %v851, 30
    %v853 = vshll.u32 %v852, 30
    %v854 = vsub.s32 %v850, %v853
    %vm855 = vcmp.lt.s32.totalorder %v854, 0
    %v856 = vsub.s32 0, %v854
    %v857 = vsel %vm855, %v856, %v854
    %v858 = vclz %v857
    %v859 = vsub.s32 %v858, 2
    %vm860 = vcmp.gt.s32.totalorder 0, %v859
    %v861 = vsel %vm860, 0, %v859
    %v862 = vsub.s32 32, %v861
    %v863 = vshll.u32 %v854, %v861
    %v864 = vshrl.u32 %v846, %v862
    %v865 = vor.u32 %v863, %v864
    %v866 = vsub.s32 4294967266, %v861
    %v867 = vadd.s32 %v866, 127
    %v868 = vshll.u32 %v867, 23
    %v869 = vor.u32 4788187, %v868
    %v870 = vand.u32 2147483647, %v869
    %v872 = vcvt.s32.f32 %v865
    %v873 = vmul.f32 %v872, %v870
    %v874 = vxor.u32 %v873, 2147483648
    %v875 = vsel %vm792, %v874, %v873
    %v876 = vsub.s32 4, %v852
    %v877 = vsel %vm792, %v876, %v852
    %v878 = vsel %vm791, %v637, %v875
    %v879 = vsel %vm791, 0, %v877
    %v880 = vcosq.f32.pop %v878
    %v881 = vsinq.f32.pop %v878
    %vm882 = vweird.f32 %v637
    %v883 = vadd.s32 %v879, 3
    %v884 = vand.u32 %v883, 3
    %vm885 = vcmp.lt.s32.totalorder %v884, 2
    %vm886 = vcmp.eq.s32.totalorder %v884, 0
    %v887 = vxor.u32 %v881, 2147483648
    %v888 = vsel %vm886, %v880, %v887
    %vm889 = vcmp.eq.s32.totalorder %v884, 2
    %v890 = vxor.u32 %v880, 2147483648
    %v891 = vsel %vm889, %v890, %v881
    %v892 = vsel %vm885, %v888, %v891
    %v893 = vsel %vm882, nan, %v892
    %v894 = vand.u32 2147483647, %v640
    %vm895 = vcmp.le.f32.partialorder %v894, 0.7853982
    %vm896 = vcmp.lt.s32.totalorder %v640, 0
    %v897 = vand.u32 %v640, 2139095040
    %v898 = vshrl.u32 %v897, 23
    %v899 = vsub.s32 %v898, 127
    %v900 = vand.u32 2147483647, %v640
    %v901 = vand.u32 %v900, 8388607
    %v902 = vor.u32 %v901, 8388608
    %v903 = vsub.s32 0, %v902
    %v904 = vadd.s32 %v899, 1
    %vm905 = vcmp.gt.s32.totalorder %v904, 0
    %v906 = vsel %vm905, %v904, 0
    %v907 = vshrl.u32 %v906, 5
    %v908 = vand.u32 %v906, 31
    %v909 = vsub.s32 32, %v908
    %v910 = vshrl.u32 683565275, %v909
    %v911 = vshll.u32 683565275, %v908
    %v912 = vshrl.u32 2475754826, %v909
    %v913 = vor.u32 %v911, %v912
    %v914 = vshll.u32 2475754826, %v908
    %v915 = vshrl.u32 2131351028, %v909
    %v916 = vor.u32 %v914, %v915
    %v917 = vshll.u32 2131351028, %v908
    %v918 = vshrl.u32 2102212464, %v909
    %v919 = vor.u32 %v917, %v918
    %v920 = vshll.u32 2102212464, %v908
    %v921 = vshrl.u32 920167782, %v909
    %v922 = vor.u32 %v920, %v921
    %v923 = vshll.u32 920167782, %v908
    %v924 = vshrl.u32 1326507024, %v909
    %v925 = vor.u32 %v923, %v924
    %vm926 = vcmp.lt.s32.totalorder %v907, 1
    %vm927 = vcmp.lt.s32.totalorder %v907, 2
    %vm928 = vcmp.lt.s32.totalorder %v907, 3
    %vm929 = vcmp.lt.s32.totalorder %v907, 4
    %v930 = vsel %vm926, %v910, %v913
    %v931 = vsel %vm929, %v919, 2102212464
    %v932 = vsel %vm928, %v916, %v931
    %v933 = vsel %vm927, %v930, %v932
    %v934 = vsel %vm926, %v913, %v916
    %v935 = vsel %vm929, %v922, 920167782
    %v936 = vsel %vm928, %v919, %v935
    %v937 = vsel %vm927, %v934, %v936
    %v938 = vsel %vm926, %v916, %v919
    %v939 = vsel %vm929, %v925, 1326507024
    %v940 = vsel %vm928, %v922, %v939
    %v941 = vsel %vm927, %v938, %v940
    %v942 = vshll.u32 %v902, 8
    %v943 = vmul.u32.u64.compose %v942, %v941
    %v944 = vextract.low.u32 %v943
    %v945 = vextract.high.u32 %v943
    %v946 = vmul.u32.u64.compose %v942, %v937
    %v947 = vextract.low.u32 %v946
    %v948 = vextract.high.u32 %v946
    %v949 = vmul.u32 %v942, %v933
    %v950 = vadd.s32 %v945, %v947
    %vm951 = vc.u32 %v945, %v947
    %v952 = vadd.s32 %v948, 1
    %v953 = vsel %vm951, %v952, %v948
    %v954 = vadd.s32 %v949, %v953
    %v955 = vadd.s32 %v954, 536870912
    %v956 = vshrl.u32 %v955, 30
    %v957 = vshll.u32 %v956, 30
    %v958 = vsub.s32 %v954, %v957
    %vm959 = vcmp.lt.s32.totalorder %v958, 0
    %v960 = vsub.s32 0, %v958
    %v961 = vsel %vm959, %v960, %v958
    %v962 = vclz %v961
    %v963 = vsub.s32 %v962, 2
    %vm964 = vcmp.gt.s32.totalorder 0, %v963
    %v965 = vsel %vm964, 0, %v963
    %v966 = vsub.s32 32, %v965
    %v967 = vshll.u32 %v958, %v965
    %v968 = vshrl.u32 %v950, %v966
    %v969 = vor.u32 %v967, %v968
    %v970 = vsub.s32 4294967266, %v965
    %v971 = vadd.s32 %v970, 127
    %v972 = vshll.u32 %v971, 23
    %v973 = vor.u32 4788187, %v972
    %v974 = vand.u32 2147483647, %v973
    %v976 = vcvt.s32.f32 %v969
    %v977 = vmul.f32 %v976, %v974
    %v978 = vxor.u32 %v977, 2147483648
    %v979 = vsel %vm896, %v978, %v977
    %v980 = vsub.s32 4, %v956
    %v981 = vsel %vm896, %v980, %v956
    %v982 = vsel %vm895, %v640, %v979
    %v983 = vsel %vm895, 0, %v981
    %v984 = vcosq.f32.pop %v982
    %v985 = vsinq.f32.pop %v982
    %vm986 = vweird.f32 %v640
    %v987 = vand.u32 %v983, 3
    %vm988 = vcmp.lt.s32.totalorder %v987, 2
    %vm989 = vcmp.eq.s32.totalorder %v987, 0
    %v990 = vxor.u32 %v985, 2147483648
    %v991 = vsel %vm989, %v984, %v990
    %vm992 = vcmp.eq.s32.totalorder %v987, 2
    %v993 = vxor.u32 %v984, 2147483648
    %v994 = vsel %vm992, %v993, %v985
    %v995 = vsel %vm988, %v991, %v994
    %v996 = vsel %vm986, nan, %v995
    %v997 = vand.u32 2147483647, %v640
    %vm998 = vcmp.le.f32.partialorder %v997, 0.7853982
    %vm999 = vcmp.lt.s32.totalorder %v640, 0
    %v1000 = vand.u32 %v640, 2139095040
    %v1001 = vshrl.u32 %v1000, 23
    %v1002 = vsub.s32 %v1001, 127
    %v1003 = vand.u32 2147483647, %v640
    %v1004 = vand.u32 %v1003, 8388607
    %v1005 = vor.u32 %v1004, 8388608
    %v1006 = vsub.s32 0, %v1005
    %v1007 = vadd.s32 %v1002, 1
    %vm1008 = vcmp.gt.s32.totalorder %v1007, 0
    %v1009 = vsel %vm1008, %v1007, 0
    %v1010 = vshrl.u32 %v1009, 5
    %v1011 = vand.u32 %v1009, 31
    %v1012 = vsub.s32 32, %v1011
    %v1013 = vshrl.u32 683565275, %v1012
    %v1014 = vshll.u32 683565275, %v1011
    %v1015 = vshrl.u32 2475754826, %v1012
    %v1016 = vor.u32 %v1014, %v1015
    %v1017 = vshll.u32 2475754826, %v1011
    %v1018 = vshrl.u32 2131351028, %v1012
    %v1019 = vor.u32 %v1017, %v1018
    %v1020 = vshll.u32 2131351028, %v1011
    %v1021 = vshrl.u32 2102212464, %v1012
    %v1022 = vor.u32 %v1020, %v1021
    %v1023 = vshll.u32 2102212464, %v1011
    %v1024 = vshrl.u32 920167782, %v1012
    %v1025 = vor.u32 %v1023, %v1024
    %v1026 = vshll.u32 920167782, %v1011
    %v1027 = vshrl.u32 1326507024, %v1012
    %v1028 = vor.u32 %v1026, %v1027
    %vm1029 = vcmp.lt.s32.totalorder %v1010, 1
    %vm1030 = vcmp.lt.s32.totalorder %v1010, 2
    %vm1031 = vcmp.lt.s32.totalorder %v1010, 3
    %vm1032 = vcmp.lt.s32.totalorder %v1010, 4
    %v1033 = vsel %vm1029, %v1013, %v1016
    %v1034 = vsel %vm1032, %v1022, 2102212464
    %v1035 = vsel %vm1031, %v1019, %v1034
    %v1036 = vsel %vm1030, %v1033, %v1035
    %v1037 = vsel %vm1029, %v1016, %v1019
    %v1038 = vsel %vm1032, %v1025, 920167782
    %v1039 = vsel %vm1031, %v1022, %v1038
    %v1040 = vsel %vm1030, %v1037, %v1039
    %v1041 = vsel %vm1029, %v1019, %v1022
    %v1042 = vsel %vm1032, %v1028, 1326507024
    %v1043 = vsel %vm1031, %v1025, %v1042
    %v1044 = vsel %vm1030, %v1041, %v1043
    %v1045 = vshll.u32 %v1005, 8
    %v1046 = vmul.u32.u64.compose %v1045, %v1044
    %v1047 = vextract.low.u32 %v1046
    %v1048 = vextract.high.u32 %v1046
    %v1049 = vmul.u32.u64.compose %v1045, %v1040
    %v1050 = vextract.low.u32 %v1049
    %v1051 = vextract.high.u32 %v1049
    %v1052 = vmul.u32 %v1045, %v1036
    %v1053 = vadd.s32 %v1048, %v1050
    %vm1054 = vc.u32 %v1048, %v1050
    %v1055 = vadd.s32 %v1051, 1
    %v1056 = vsel %vm1054, %v1055, %v1051
    %v1057 = vadd.s32 %v1052, %v1056
    %v1058 = vadd.s32 %v1057, 536870912
    %v1059 = vshrl.u32 %v1058, 30
    %v1060 = vshll.u32 %v1059, 30
    %v1061 = vsub.s32 %v1057, %v1060
    %vm1062 = vcmp.lt.s32.totalorder %v1061, 0
    %v1063 = vsub.s32 0, %v1061
    %v1064 = vsel %vm1062, %v1063, %v1061
    %v1065 = vclz %v1064
    %v1066 = vsub.s32 %v1065, 2
    %vm1067 = vcmp.gt.s32.totalorder 0, %v1066
    %v1068 = vsel %vm1067, 0, %v1066
    %v1069 = vsub.s32 32, %v1068
    %v1070 = vshll.u32 %v1061, %v1068
    %v1071 = vshrl.u32 %v1053, %v1069
    %v1072 = vor.u32 %v1070, %v1071
    %v1073 = vsub.s32 4294967266, %v1068
    %v1074 = vadd.s32 %v1073, 127
    %v1075 = vshll.u32 %v1074, 23
    %v1076 = vor.u32 4788187, %v1075
    %v1077 = vand.u32 2147483647, %v1076
    %v1079 = vcvt.s32.f32 %v1072
    %v1080 = vmul.f32 %v1079, %v1077
    %v1081 = vxor.u32 %v1080, 2147483648
    %v1082 = vsel %vm999, %v1081, %v1080
    %v1083 = vsub.s32 4, %v1059
    %v1084 = vsel %vm999, %v1083, %v1059
    %v1085 = vsel %vm998, %v640, %v1082
    %v1086 = vsel %vm998, 0, %v1084
    %v1087 = vcosq.f32.pop %v1085
    %v1088 = vsinq.f32.pop %v1085
    %vm1089 = vweird.f32 %v640
    %v1090 = vadd.s32 %v1086, 3
    %v1091 = vand.u32 %v1090, 3
    %vm1092 = vcmp.lt.s32.totalorder %v1091, 2
    %vm1093 = vcmp.eq.s32.totalorder %v1091, 0
    %v1094 = vxor.u32 %v1088, 2147483648
    %v1095 = vsel %vm1093, %v1087, %v1094
    %vm1096 = vcmp.eq.s32.totalorder %v1091, 2
    %v1097 = vxor.u32 %v1087, 2147483648
    %v1098 = vsel %vm1096, %v1097, %v1088
    %v1099 = vsel %vm1092, %v1095, %v1098
    %v1100 = vsel %vm1089, nan, %v1099
    %v1101 = vmul.f32 %v684, %v996
    %v1102 = vmul.f32 %v686, %v893
    %v1103 = vmul.f32 %v1102, %v1100
    %v1104 = vsub.f32 %v1101, %v1103
    %v1105 = vsub.f32 0.0, %v686
    %v1106 = vmul.f32 %v1105, %v789
    %v1107 = vmul.f32 %v684, %v1100
    %v1108 = vmul.f32 %v1102, %v996
    %v1109 = vadd.f32 %v1107, %v1108
    %v1110 = vmul.f32 %v686, %v996
    %v1111 = vmul.f32 %v684, %v893
    %v1112 = vmul.f32 %v1111, %v1100
    %v1113 = vadd.f32 %v1110, %v1112
    %v1114 = vmul.f32 %v684, %v789
    %v1115 = vmul.f32 %v686, %v1100
    %v1116 = vmul.f32 %v1111, %v996
    %v1117 = vsub.f32 %v1115, %v1116
    %v1118 = vsub.f32 0.0, %v789
    %v1119 = vmul.f32 %v1118, %v1100
    %v1120 = vmul.f32 %v789, %v996
    %v1121 = vmul.f32 %v1104, %v660
    %v1122 = vmul.f32 %v1113, %v669
    %v1123 = vadd.f32 %v1121, %v1122
    %v1124 = vmul.f32 %v1119, %v676
    %v1125 = vadd.f32 %v1123, %v1124
    %v1126 = vmul.f32 %v1106, %v660
    %v1127 = vmul.f32 %v1114, %v669
    %v1128 = vadd.f32 %v1126, %v1127
    %v1129 = vmul.f32 %v893, %v676
    %v1130 = vadd.f32 %v1128, %v1129
    %v1131 = vmul.f32 %v1109, %v660
    %v1132 = vmul.f32 %v1117, %v669
    %v1133 = vadd.f32 %v1131, %v1132
    %v1134 = vmul.f32 %v1120, %v676
    %v1135 = vadd.f32 %v1133, %v1134
    %v1136 = vmul.f32 %v1109, %v652
    %v1137 = vmul.f32 %v1117, %v662
    %v1138 = vadd.f32 %v1136, %v1137
    %v1139 = vmul.f32 %v1120, %v671
    %v1140 = vadd.f32 %v1138, %v1139
    %v1141 = vmul.f32 %v1109, %v656
    %v1142 = vmul.f32 %v1117, %v665
    %v1143 = vadd.f32 %v1141, %v1142
    %v1144 = vmul.f32 %v1120, %v673
    %v1145 = vadd.f32 %v1143, %v1144
    %v1146 = vsub.f32 %v1145, %v1130
    %v1147 = vmul.f32 %v1146, 0.5
    %v1148 = vsub.f32 %v1125, %v1140
    %v1149 = vmul.f32 %v1148, 0.5
    %v1150 = vmul.f32 %v1125, %v634
    %v1151 = vsub.f32 %v622, %v1150
    %v1152 = vmul.f32 %v1130, %v634
    %v1153 = vsub.f32 %v625, %v1152
    %v1154 = vmul.f32 %v1135, %v634
    %v1155 = vsub.f32 %v628, %v1154
    %v1156 = vsub.f32 0.0, %v1147
    %v1157 = vmul.f32 %v1156, 428.57144
    %v1158 = vmul.f32 %v1151, 74.28571
    %v1159 = vsub.f32 %v1157, %v1158
    %v1160 = vsub.f32 0.0, %v1149
    %v1161 = vmul.f32 %v1160, 428.57144
    %v1162 = vmul.f32 %v1153, 74.28571
    %v1163 = vsub.f32 %v1161, %v1162
    %v1164 = vsub.f32 0.0, %v1155
    %v1165 = vmul.f32 %v1164, 2.0833333
    %v1166 = vmul.f32 %v1159, 0.0048501156
    %v1167 = vmul.f32 %v1163, -0.0048501156
    %v1168 = vadd.f32 %v1166, %v1167
    %v1169 = vmul.f32 %v1165, -5.340024e-07
    %v1170 = vadd.f32 %v1168, %v1169
    %v1171 = vmul.f32 %v631, 0.083289064
    %v1172 = vadd.f32 %v1170, %v1171
    %v1173 = vsub.f32 %v1172, 1.0
    %s1174 = scalar_lea.vmem [#allocation5], 8
    %1175 = vst [vmem:[%s1174] sm:$0xff] %v1173
    %v1176 = vmul.f32 %v1163, 0.0048501156
    %v1177 = vadd.f32 %v1166, %v1176
    %v1178 = vmul.f32 %v1165, 5.340024e-07
    %v1179 = vadd.f32 %v1177, %v1178
    %v1180 = vadd.f32 %v1179, %v1171
    %v1181 = vsub.f32 %v1180, 1.0
    %s1182 = scalar_lea.vmem [#allocation5], %s611
    %1183 = vst [vmem:[%s1182] sm:$0xff] %v1181
    %v1184 = vmul.f32 %v1159, -0.0048501156
    %v1185 = vadd.f32 %v1184, %v1176
    %v1186 = vadd.f32 %v1185, %v1169
    %v1187 = vadd.f32 %v1186, %v1171
    %v1188 = vsub.f32 %v1187, 1.0
    %s1189 = scalar_lea.vmem [#allocation5], %s614
    %1190 = vst [vmem:[%s1189] sm:$0xff] %v1188
    %v1191 = vadd.f32 %v1184, %v1167
    %v1192 = vadd.f32 %v1191, %v1178
    %v1193 = vadd.f32 %v1192, %v1171
    %v1194 = vsub.f32 %v1193, 1.0
    %s1195 = scalar_lea.vmem [#allocation5], %s617
    %1196 = vst [vmem:[%s1195] sm:$0xff] %v1194
    // Predicated region
    $region10: #{tpu_custom_call.1} parent=1 // pred_check
      _
    $region11: #{tpu_custom_call.1} parent=1 // pred_check_branch
      %1198 = sbr.rel (0) target = $region13
    $region12: #{tpu_custom_call.1} parent=1 // pred_region
      %s1200 = ssub.s32 1024, 1024
      %1201 = vsyncadd [#allocation4], %s1200
      %s1202 = sshll.u32 [#allocation5], 4
      %s1203 = int_to_ptr.vmem [resolvable:$true] %s1202
      %1208 = dma.vmem_to_hbm [thread:$0]  %s1203, 1024, %s1, [#allocation4], 128, 128, 8
    $region13: #{tpu_custom_call.1} parent=1 // pred_fallthru
      _
    // Predicated region
    $region14: #{tpu_custom_call.1} parent=1 // pred_check
      _
    $region15: #{tpu_custom_call.1} parent=1 // pred_check_branch
      %1210 = sbr.rel (0) target = $region17
    $region16: #{tpu_custom_call.1} parent=1 // pred_region
      %1211 = dma.done [#allocation4], 1024
    $region17: #{tpu_custom_call.1} parent=1 // pred_fallthru
      _
    %1212 = vsyncpa [#allocation3], 1
    %1213 = vsyncpa [#allocation4], 1

</llo_original>
